<compile_context>
chip_gen: v7x
topology: tpu7x:2x2x1
jax: 0.10.0
libtpu: 0.0.40
codegen_flags: <defaults>
</compile_context>

<pallas_src>
import jax
import jax.numpy as jnp
from jax import lax
from jax.experimental import pallas as pl
from jax.experimental.pallas import tpu as pltpu


_EPS_BCE = 1e-7   # matches the PyTorch clip_by_tensor epsilon
_EPS_DIV = 1e-9   # guards 0/0 on zero-area background boxes


# ----------------------------------------------------------------------------
# Pallas kernel: fused per-chunk loss partial sums (all levels concatenated)
# ----------------------------------------------------------------------------
def _yolo_loss_kernel(main_ref, pcls_ref, out_ref):
    """Per-chunk fused YOLO-loss partial sums.

    main_ref : (12, TR, 128) f32
        planes 0..3  : pred box x, y, w, h   (grid units)
        planes 4..7  : true box x, y, w, h
        plane  8     : obj mask (1.0 at assigned cells)
        plane  9     : noobj mask
        plane 10     : pred objectness
        plane 11     : class index (float; only meaningful where obj == 1)
    pcls_ref : (C, TR, 128) bf16 predicted class probabilities
    out_ref  : (TR, 128) f32 per-row sums:
               lane 0: sum_{obj} (1 - giou)
               lane 1: sum obj
               lane 2: sum_{obj} sum_c BCE(pcls_c, onehot_c)
               lane 3: sum_{noobj|obj} BCE(pconf, obj)
               lane 4: count(noobj | obj)
               lanes 5..127: 0
    """
    pbx, pby, pbw, pbh = main_ref[0], main_ref[1], main_ref[2], main_ref[3]
    tbx, tby, tbw, tbh = main_ref[4], main_ref[5], main_ref[6], main_ref[7]
    obj = main_ref[8]
    noobj = main_ref[9]
    pconf = main_ref[10]
    cidx = main_ref[11]
    obj_b = obj > 0.5

    # ---------------- GIoU(pred_boxes, y_true[..., :4]) ----------------
    b1_minx, b1_maxx = pbx - 0.5 * pbw, pbx + 0.5 * pbw
    b1_miny, b1_maxy = pby - 0.5 * pbh, pby + 0.5 * pbh
    b2_minx, b2_maxx = tbx - 0.5 * tbw, tbx + 0.5 * tbw
    b2_miny, b2_maxy = tby - 0.5 * tbh, tby + 0.5 * tbh

    iw = jnp.maximum(
        jnp.minimum(b1_maxx, b2_maxx) - jnp.maximum(b1_minx, b2_minx), 0.0)
    ih = jnp.maximum(
        jnp.minimum(b1_maxy, b2_maxy) - jnp.maximum(b1_miny, b2_miny), 0.0)
    inter = iw * ih
    union = pbw * pbh + tbw * tbh - inter
    iou = inter / (union + _EPS_DIV)            # exact divide (mem-bound kernel)

    ew = jnp.maximum(
        jnp.maximum(b1_maxx, b2_maxx) - jnp.minimum(b1_minx, b2_minx), 0.0)
    eh = jnp.maximum(
        jnp.maximum(b1_maxy, b2_maxy) - jnp.minimum(b1_miny, b2_miny), 0.0)
    enclose = ew * eh
    giou = iou - (enclose - union) / (enclose + _EPS_DIV)

    loc_q = jnp.where(obj_b, 1.0 - giou, 0.0)                    # (TR, 128)

    # --- class BCE: fori_loop over C, one-hot reconstructed from cidx -----
    tr = out_ref.shape[0]
    num_cls = pcls_ref.shape[0]

    def cls_body(c, acc):
        p = pcls_ref[c].astype(jnp.float32)                       # (TR, 128)
        t = cidx == c.astype(jnp.float32)                         # exact for small ints
        p_sel = jnp.clip(jnp.where(t, p, 1.0 - p), _EPS_BCE, 1.0 - _EPS_BCE)
        return acc - jnp.log(p_sel)

    bce_cls = lax.fori_loop(0, num_cls, cls_body,
                            jnp.zeros((tr, 128), jnp.float32))
    cls_q = jnp.where(obj_b, bce_cls, 0.0)                        # (TR, 128)

    # ----------------- objectness BCE (target = obj mask) ------------------
    p_conf = jnp.clip(jnp.where(obj_b, pconf, 1.0 - pconf),
                      _EPS_BCE, 1.0 - _EPS_BCE)
    bce_conf = -jnp.log(p_conf)
    conf_mask = jnp.logical_or(noobj > 0.5, obj_b)
    conf_q = jnp.where(conf_mask, bce_conf, 0.0)
    nconf_q = conf_mask.astype(jnp.float32)

    # --------- per-row partial sums -> lane-dense (TR, 128) output ---------
    lane = lax.broadcasted_iota(jnp.int32, (tr, 128), 1)

    def rsum(x):
        return jnp.sum(x, axis=-1, keepdims=True)                 # (TR, 1)

    out = jnp.where(lane == 0, rsum(loc_q), 0.0)
    out = jnp.where(lane == 1, rsum(obj), out)
    out = jnp.where(lane == 2, rsum(cls_q), out)
    out = jnp.where(lane == 3, rsum(conf_q), out)
    out = jnp.where(lane == 4, rsum(nconf_q), out)
    out_ref[...] = out.astype(out_ref.dtype)


def _fused_level_sums(main3, pcls3, *, tile_rows):
    """main3 (12,R,128) f32, pcls3 (C,R,128) bf16 -> (R, 128) row sums."""
    num_cls = pcls3.shape[0]
    r_pad = main3.shape[1]
    if pcls3.dtype == jnp.bfloat16:
        assert tile_rows % 16 == 0, "bf16 blocks need tile_rows % 16 == 0"
    grid = (r_pad // tile_rows,)
    return pl.pallas_call(
        _yolo_loss_kernel,
        out_shape=jax.ShapeDtypeStruct((r_pad, 128), jnp.float32),
        grid=grid,
        in_specs=[
            pl.BlockSpec((12, tile_rows, 128), lambda c: (0, c, 0)),
            pl.BlockSpec((num_cls, tile_rows, 128), lambda c: (0, c, 0)),
        ],
        out_specs=pl.BlockSpec((tile_rows, 128), lambda c: (c, 0)),
        compiler_params=pltpu.CompilerParams(
            dimension_semantics=("parallel",),
            vmem_limit_bytes=48 << 20),
    )(main3, pcls3)


# ----------------------------------------------------------------------------
# JAX glue: target building (data-dependent scatter -> not a Pallas hot path)
# ----------------------------------------------------------------------------
def _xywh2xyxy(box):
    xy, wh = box[..., :2], box[..., 2:4]
    return jnp.concatenate([xy - wh * 0.5, xy + wh * 0.5], axis=-1)


def _calc_iou(box_a, box_b):
    a = _xywh2xyxy(box_a)
    b = _xywh2xyxy(box_b)
    max_xy = jnp.minimum(a[:, None, 2:], b[None, :, 2:])
    min_xy = jnp.maximum(a[:, None, :2], b[None, :, :2])
    inter = jnp.maximum(max_xy - min_xy, 0.0)
    inter = inter[..., 0] * inter[..., 1]
    area_a = ((a[:, 2] - a[:, 0]) * (a[:, 3] - a[:, 1]))[:, None]
    area_b = ((b[:, 2] - b[:, 0]) * (b[:, 3] - b[:, 1]))[None, :]
    return inter / (area_a + area_b - inter)


def _build_target(pred_boxes, targets, targets_valid, scaled_anchors_l,
                  grid_h, grid_w, ignore_threshold=0.5):
    # TODO(synk): per-target argmax + dynamic cell scatter stays in plain JAX.
    A = scaled_anchors_l.shape[0]
    T = targets.shape[1]

    def per_batch(pred_b, tgt, valid):
        bt = jnp.stack([tgt[:, 0] * grid_w, tgt[:, 1] * grid_h,
                        tgt[:, 2] * grid_w, tgt[:, 3] * grid_h,
                        tgt[:, 4]], axis=1)                       # (T, 5)
        gt_box = jnp.concatenate(
            [jnp.zeros((T, 2), jnp.float32), bt[:, 2:4]], axis=1)
        anc_box = jnp.concatenate(
            [jnp.zeros((A, 2), jnp.float32), scaled_anchors_l], axis=1)
        best_n = jnp.argmax(_calc_iou(gt_box, anc_box), axis=-1)  # (T,)
        ii = jnp.floor(bt[:, 0]).astype(jnp.int32)
        jj = jnp.floor(bt[:, 1]).astype(jnp.int32)
        jj = jnp.where(valid, jj, grid_h + 7)    # OOB row -> dropped scatter

        noobj = jnp.ones((A, grid_h, grid_w), jnp.float32)
        y_true = jnp.zeros((A, grid_h, grid_w, 5), jnp.float32)
        cls_idx = jnp.zeros((A, grid_h, grid_w), jnp.float32)

        noobj = noobj.at[best_n, jj, ii].set(0.0, mode='drop')
        y_true = y_true.at[best_n, jj, ii, 0].set(bt[:, 0], mode='drop')
        y_true = y_true.at[best_n, jj, ii, 1].set(bt[:, 1], mode='drop')
        y_true = y_true.at[best_n, jj, ii, 2].set(bt[:, 2], mode='drop')
        y_true = y_true.at[best_n, jj, ii, 3].set(bt[:, 3], mode='drop')
        y_true = y_true.at[best_n, jj, ii, 4].set(1.0, mode='drop')
        cls_idx = cls_idx.at[best_n, jj, ii].set(bt[:, 4], mode='drop')
        # NOTE: box_loss_scale is only needed by the giou=False branch.

        # ignore mask: cells whose pred box overlaps any GT with IoU > thr
        pred_flat = pred_b.reshape(-1, 4)
        ious = _calc_iou(bt[:, :4], pred_flat)                    # (T, A*gw*gh)
        ious = jnp.where(valid[:, None], ious, 0.0)
        iou_max = jnp.max(ious, axis=0).reshape(pred_b.shape[:3])
        noobj = jnp.where(iou_max > ignore_threshold, 0.0, noobj)
        return y_true, noobj, cls_idx

    return jax.vmap(per_batch)(pred_boxes, targets, targets_valid)


# ----------------------------------------------------------------------------
# Padding helpers (host side, fused by XLA)
# ----------------------------------------------------------------------------
def _pad_last_to_multiple(x, multiple):
    pad = (-x.shape[-1]) % multiple
    if pad == 0:
        return x
    widths = [(0, 0)] * (x.ndim - 1) + [(0, pad)]
    return jnp.pad(x, widths)


def _pad_last_to_size(x, size):
    pad = size - x.shape[-1]
    if pad == 0:
        return x
    widths = [(0, 0)] * (x.ndim - 1) + [(0, pad)]
    return jnp.pad(x, widths)


# ----------------------------------------------------------------------------
# Forward (mirrors YoloLoss.forward with self.giou == True)
# ----------------------------------------------------------------------------
def yolo_loss_forward(outputs, predictions, targets, targets_valid, *,
                      anchors, num_classes, input_shape,
                      anchors_mask=((6, 7, 8), (3, 4, 5), (0, 1, 2)),
                      tile_rows=32):
    # tile_rows: 32 fits the v5e default scoped VMEM; raise to 64-128 on
    # v6e and 64 on v7x (vmem_limit_bytes already raised in _fused_level_sums).
    balance = (0.4, 1.0, 4.0)
    box_ratio = 0.05
    obj_ratio = 5.0 * (input_shape[0] * input_shape[1]) / (416.0 ** 2)
    cls_ratio = 1.0 * (num_classes / 80.0)

    main_parts, pcls_parts, level_rows = [], [], []
    for l, (output, prediction) in enumerate(zip(outputs, predictions)):
        bs, A, gw, gh = prediction.shape[:4]
        stride_h = input_shape[0] / gh
        stride_w = input_shape[1] / gw
        scaled_anchors = jnp.array(
            [(aw / stride_w, ah / stride_h) for aw, ah in anchors],
            dtype=jnp.float32)

        # TODO(synk): folding this scale into the kernel (per-level gw/gh via
        # scalar prefetch) would save one wrapper pass, but pred_boxes is also
        # consumed by _build_target, so the pass is kept here.
        scale = jnp.array([gw, gh, gw, gh], dtype=jnp.float32)
        pred_boxes = output[..., :4] * scale          # (bs, A, gw, gh, 4)
        pred_conf = output[..., 4]                    # (bs, A, gw, gh)
        pred_cls = output[..., 5:]                    # (bs, A, gw, gh, C)

        anchors_l = scaled_anchors[jnp.array(anchors_mask[l])]
        y_true5, noobj_mask, cls_idx = _build_target(
            pred_boxes, targets, targets_valid, anchors_l, gh, gw)

        obj = (y_true5[..., 4] == 1.0).astype(jnp.float32)

        n = bs * A * gw * gh
        # Attribute-major planes: one relayout buys fully dense vregs in the
        # kernel.  All non-class planes are merged into a single operand.
        pb = jnp.moveaxis(pred_boxes, -1, 0).reshape(4, n)
        tb = jnp.moveaxis(y_true5[..., :4], -1, 0).reshape(4, n)
        mc = jnp.stack([obj.reshape(n), noobj_mask.reshape(n),
                        pred_conf.reshape(n), cls_idx.reshape(n)], axis=0)
        main_l = jnp.concatenate([pb, tb, mc], axis=0)          # (12, n) f32
        pc = jnp.moveaxis(pred_cls, -1, 0).reshape(num_classes, n)
        pc = pc.astype(jnp.bfloat16)                             # DMA halved

        main_parts.append(_pad_last_to_multiple(main_l, 128))
        pcls_parts.append(_pad_last_to_multiple(pc, 128))
        level_rows.append(main_parts[-1].shape[1] // 128)

    main_all = jnp.concatenate(main_parts, axis=1)
    pcls_all = jnp.concatenate(pcls_parts, axis=1)

    r_tot = main_all.shape[1] // 128
    r_pad = ((r_tot + tile_rows - 1) // tile_rows) * tile_rows
    n_pad = r_pad * 128

    main3 = _pad_last_to_size(main_all, n_pad).reshape(12, r_pad, 128)
    pcls3 = _pad_last_to_size(pcls_all, n_pad).reshape(num_classes, r_pad, 128)

    row_sums = _fused_level_sums(main3, pcls3, tile_rows=tile_rows)  # (r_pad,128)

    # Tiny per-level scalar finish (padded rows contribute exact zeros:
    # obj = noobj = 0 there, so every sum/count term vanishes).
    loss_total = jnp.zeros((), jnp.float32)
    r0 = 0
    for l, rows in enumerate(level_rows):
        s = jnp.sum(row_sums[r0:r0 + rows, :5], axis=0)
        loc_sum, n_obj, cls_sum, conf_sum, n_conf = s[0], s[1], s[2], s[3], s[4]
        has_obj = n_obj > 0.0
        loss_loc = jnp.where(has_obj, loc_sum / jnp.maximum(n_obj, 1.0), 0.0)
        loss_cls = jnp.where(
            has_obj, cls_sum / jnp.maximum(n_obj * num_classes, 1.0), 0.0)
        loss_conf = jnp.where(
            n_conf > 0.0, conf_sum / jnp.maximum(n_conf, 1.0), 0.0)
        loss_total = loss_total + (loss_loc * box_ratio
                                   + loss_cls * cls_ratio
                                   + loss_conf * (float(balance[l]) * obj_ratio))
        r0 += rows
    return loss_total


# ----------------------------------------------------------------------------
# Pure-JAX reference (exact divides, two-log BCE, f32 class probs)
# ----------------------------------------------------------------------------
def yolo_loss_reference(outputs, predictions, targets, targets_valid, *,
                        anchors, num_classes, input_shape,
                        anchors_mask=((6, 7, 8), (3, 4, 5), (0, 1, 2))):
    balance = (0.4, 1.0, 4.0)
    box_ratio = 0.05
    obj_ratio = 5.0 * (input_shape[0] * input_shape[1]) / (416.0 ** 2)
    cls_ratio = 1.0 * (num_classes / 80.0)
    eps = 1e-7

    def bce(p, t):
        p = jnp.clip(p, eps, 1.0 - eps)
        return -t * jnp.log(p) - (1.0 - t) * jnp.log(1.0 - p)

    total = jnp.zeros((), jnp.float32)
    for l, (output, prediction) in enumerate(zip(outputs, predictions)):
        bs, A, gw, gh = prediction.shape[:4]
        stride_h = input_shape[0] / gh
        stride_w = input_shape[1] / gw
        scaled_anchors = jnp.array(
            [(aw / stride_w, ah / stride_h) for aw, ah in anchors], jnp.float32)
        scale = jnp.array([gw, gh, gw, gh], jnp.float32)
        pred_boxes = output[..., :4] * scale
        pred_conf = output[..., 4]
        pred_cls = output[..., 5:]
        anchors_l = scaled_anchors[jnp.array(anchors_mask[l])]
        y_true5, noobj_mask, cls_idx = _build_target(
            pred_boxes, targets, targets_valid, anchors_l, gh, gw)

        obj = y_true5[..., 4] == 1.0
        n_obj = jnp.sum(obj.astype(jnp.float32))

        b1_xy, b1_wh = pred_boxes[..., :2], pred_boxes[..., 2:4]
        b2_xy, b2_wh = y_true5[..., :2], y_true5[..., 2:4]
        b1_min, b1_max = b1_xy - b1_wh / 2, b1_xy + b1_wh / 2
        b2_min, b2_max = b2_xy - b2_wh / 2, b2_xy + b2_wh / 2
        iwh = jnp.maximum(jnp.minimum(b1_max, b2_max)
                          - jnp.maximum(b1_min, b2_min), 0.0)
        inter = iwh[..., 0] * iwh[..., 1]
        union = (b1_wh[..., 0] * b1_wh[..., 1]
                 + b2_wh[..., 0] * b2_wh[..., 1] - inter)
        ewh = jnp.maximum(jnp.maximum(b1_max, b2_max)
                          - jnp.minimum(b1_min, b2_min), 0.0)
        enclose = ewh[..., 0] * ewh[..., 1]
        giou = inter / union - (enclose - union) / enclose

        loc_sum = jnp.sum(jnp.where(obj, 1.0 - giou, 0.0))
        loss_loc = jnp.where(n_obj > 0, loc_sum / jnp.maximum(n_obj, 1.0), 0.0)

        onehot = (cls_idx[..., None]
                  == jnp.arange(num_classes, dtype=jnp.float32)).astype(jnp.float32)
        cls_sum = jnp.sum(jnp.where(obj[..., None], bce(pred_cls, onehot), 0.0))
        loss_cls = jnp.where(
            n_obj > 0, cls_sum / jnp.maximum(n_obj * num_classes, 1.0), 0.0)

        conf_mask = jnp.logical_or(noobj_mask > 0.5, obj)
        n_conf = jnp.sum(conf_mask.astype(jnp.float32))
        conf_sum = jnp.sum(jnp.where(
            conf_mask, bce(pred_conf, obj.astype(jnp.float32)), 0.0))
        loss_conf = jnp.where(n_conf > 0,
                              conf_sum / jnp.maximum(n_conf, 1.0), 0.0)

        total = total + (loss_loc * box_ratio + loss_cls * cls_ratio
                         + loss_conf * (float(balance[l]) * obj_ratio))
    return total


# ----------------------------------------------------------------------------
if __name__ == "__main__":
    key = jax.random.PRNGKey(0)

    num_classes = 4
    bbox_attrs = 5 + num_classes
    input_shape = (64, 64)
    # 9 anchors (pixel units for the 64x64 input), standard 3x3 mask layout.
    anchors = [(6, 8), (10, 14), (16, 12), (20, 24), (28, 20),
               (32, 40), (44, 36), (52, 56), (60, 48)]

    bs, A = 2, 3
    grids = (8, 16, 32)   # three pyramid levels -> N = 384, 1536, 6144

    outputs, predictions = [], []
    for g in grids:
        key, k1, k2 = jax.random.split(key, 3)
        # decoded head outputs: normalized xywh + conf + class probs in (0,1)
        outputs.append(jax.random.uniform(
            k1, (bs, A, g, g, bbox_attrs), jnp.float32, 1e-3, 1.0 - 1e-3))
        # raw predictions (only shape is consumed in the giou branch)
        predictions.append(jax.random.uniform(
            k2, (bs, A, g, g, bbox_attrs), jnp.float32))

    # fixed-size targets (bs, T, 5): normalized (x, y, w, h, class)
    targets = jnp.array(
        [[[0.30, 0.40, 0.20, 0.25, 1.0],
          [0.70, 0.60, 0.15, 0.30, 3.0]],
         [[0.50, 0.50, 0.30, 0.20, 0.0],
          [0.00, 0.00, 0.00, 0.00, 0.0]]], dtype=jnp.float32)
    targets_valid = jnp.array([[True, True], [True, False]])

    loss_fn = jax.jit(lambda o, p, t, v: yolo_loss_forward(
        o, p, t, v, anchors=anchors, num_classes=num_classes,
        input_shape=input_shape))
    loss = jax.block_until_ready(
        loss_fn(tuple(outputs), tuple(predictions), targets, targets_valid))

    ref = jax.block_until_ready(yolo_loss_reference(
        tuple(outputs), tuple(predictions), targets, targets_valid,
        anchors=anchors, num_classes=num_classes, input_shape=input_shape))

    assert jnp.isfinite(loss), loss
    assert jnp.allclose(loss, ref, rtol=2e-2, atol=1e-3), (loss, ref)
    print("KERNEL_OK")
</pallas_src>

<mosaic_0001>
module attributes {stable_mosaic.version = 11 : i64} {
  func.func @_yolo_loss_kernel(%arg0: i32, %arg1: memref<12x32x128xf32, #tpu.memory_space<vmem>>, %arg2: memref<4x32x128xbf16, #tpu.memory_space<vmem>>, %arg3: memref<32x128xf32, #tpu.memory_space<vmem>>) attributes {dimension_semantics = [#tpu.dimension_semantics<parallel>], iteration_bounds = array<i64: 2>, scalar_prefetch = 0 : i64, scratch_operands = 0 : i64, tpu.core_type = #tpu.core_type<tc>, window_params = [{transform_indices = @transform_0, window_bounds = array<i64: 12, 32, 128>}, {transform_indices = @transform_1, window_bounds = array<i64: 4, 32, 128>}, {transform_indices = @transform_2, window_bounds = array<i64: 32, 128>}]} {
    %c0 = arith.constant 0 : index
    %c0_0 = arith.constant 0 : index
    %c0_1 = arith.constant 0 : index
    %0 = vector.load %arg1[%c0, %c0_0, %c0_1] : memref<12x32x128xf32, #tpu.memory_space<vmem>>, vector<1x32x128xf32>
    %1 = vector.shape_cast %0 : vector<1x32x128xf32> to vector<32x128xf32>
    %c1 = arith.constant 1 : index
    %c0_2 = arith.constant 0 : index
    %c0_3 = arith.constant 0 : index
    %2 = vector.load %arg1[%c1, %c0_2, %c0_3] : memref<12x32x128xf32, #tpu.memory_space<vmem>>, vector<1x32x128xf32>
    %3 = vector.shape_cast %2 : vector<1x32x128xf32> to vector<32x128xf32>
    %c2 = arith.constant 2 : index
    %c0_4 = arith.constant 0 : index
    %c0_5 = arith.constant 0 : index
    %4 = vector.load %arg1[%c2, %c0_4, %c0_5] : memref<12x32x128xf32, #tpu.memory_space<vmem>>, vector<1x32x128xf32>
    %5 = vector.shape_cast %4 : vector<1x32x128xf32> to vector<32x128xf32>
    %c3 = arith.constant 3 : index
    %c0_6 = arith.constant 0 : index
    %c0_7 = arith.constant 0 : index
    %6 = vector.load %arg1[%c3, %c0_6, %c0_7] : memref<12x32x128xf32, #tpu.memory_space<vmem>>, vector<1x32x128xf32>
    %7 = vector.shape_cast %6 : vector<1x32x128xf32> to vector<32x128xf32>
    %c4 = arith.constant 4 : index
    %c0_8 = arith.constant 0 : index
    %c0_9 = arith.constant 0 : index
    %8 = vector.load %arg1[%c4, %c0_8, %c0_9] : memref<12x32x128xf32, #tpu.memory_space<vmem>>, vector<1x32x128xf32>
    %9 = vector.shape_cast %8 : vector<1x32x128xf32> to vector<32x128xf32>
    %c5 = arith.constant 5 : index
    %c0_10 = arith.constant 0 : index
    %c0_11 = arith.constant 0 : index
    %10 = vector.load %arg1[%c5, %c0_10, %c0_11] : memref<12x32x128xf32, #tpu.memory_space<vmem>>, vector<1x32x128xf32>
    %11 = vector.shape_cast %10 : vector<1x32x128xf32> to vector<32x128xf32>
    %c6 = arith.constant 6 : index
    %c0_12 = arith.constant 0 : index
    %c0_13 = arith.constant 0 : index
    %12 = vector.load %arg1[%c6, %c0_12, %c0_13] : memref<12x32x128xf32, #tpu.memory_space<vmem>>, vector<1x32x128xf32>
    %13 = vector.shape_cast %12 : vector<1x32x128xf32> to vector<32x128xf32>
    %c7 = arith.constant 7 : index
    %c0_14 = arith.constant 0 : index
    %c0_15 = arith.constant 0 : index
    %14 = vector.load %arg1[%c7, %c0_14, %c0_15] : memref<12x32x128xf32, #tpu.memory_space<vmem>>, vector<1x32x128xf32>
    %15 = vector.shape_cast %14 : vector<1x32x128xf32> to vector<32x128xf32>
    %c8 = arith.constant 8 : index
    %c0_16 = arith.constant 0 : index
    %c0_17 = arith.constant 0 : index
    %16 = vector.load %arg1[%c8, %c0_16, %c0_17] : memref<12x32x128xf32, #tpu.memory_space<vmem>>, vector<1x32x128xf32>
    %17 = vector.shape_cast %16 : vector<1x32x128xf32> to vector<32x128xf32>
    %c9 = arith.constant 9 : index
    %c0_18 = arith.constant 0 : index
    %c0_19 = arith.constant 0 : index
    %18 = vector.load %arg1[%c9, %c0_18, %c0_19] : memref<12x32x128xf32, #tpu.memory_space<vmem>>, vector<1x32x128xf32>
    %19 = vector.shape_cast %18 : vector<1x32x128xf32> to vector<32x128xf32>
    %c10 = arith.constant 10 : index
    %c0_20 = arith.constant 0 : index
    %c0_21 = arith.constant 0 : index
    %20 = vector.load %arg1[%c10, %c0_20, %c0_21] : memref<12x32x128xf32, #tpu.memory_space<vmem>>, vector<1x32x128xf32>
    %21 = vector.shape_cast %20 : vector<1x32x128xf32> to vector<32x128xf32>
    %c11 = arith.constant 11 : index
    %c0_22 = arith.constant 0 : index
    %c0_23 = arith.constant 0 : index
    %22 = vector.load %arg1[%c11, %c0_22, %c0_23] : memref<12x32x128xf32, #tpu.memory_space<vmem>>, vector<1x32x128xf32>
    %23 = vector.shape_cast %22 : vector<1x32x128xf32> to vector<32x128xf32>
    %cst = arith.constant 5.000000e-01 : f32
    %24 = vector.broadcast %cst : f32 to vector<32x128xf32>
    %25 = arith.cmpf ogt, %17, %24 : vector<32x128xf32>
    %cst_24 = arith.constant 5.000000e-01 : f32
    %26 = vector.broadcast %cst_24 : f32 to vector<32x128xf32>
    %27 = arith.mulf %26, %5 : vector<32x128xf32>
    %28 = arith.subf %1, %27 : vector<32x128xf32>
    %cst_25 = arith.constant 5.000000e-01 : f32
    %29 = vector.broadcast %cst_25 : f32 to vector<32x128xf32>
    %30 = arith.mulf %29, %5 : vector<32x128xf32>
    %31 = arith.addf %1, %30 : vector<32x128xf32>
    %cst_26 = arith.constant 5.000000e-01 : f32
    %32 = vector.broadcast %cst_26 : f32 to vector<32x128xf32>
    %33 = arith.mulf %32, %7 : vector<32x128xf32>
    %34 = arith.subf %3, %33 : vector<32x128xf32>
    %cst_27 = arith.constant 5.000000e-01 : f32
    %35 = vector.broadcast %cst_27 : f32 to vector<32x128xf32>
    %36 = arith.mulf %35, %7 : vector<32x128xf32>
    %37 = arith.addf %3, %36 : vector<32x128xf32>
    %cst_28 = arith.constant 5.000000e-01 : f32
    %38 = vector.broadcast %cst_28 : f32 to vector<32x128xf32>
    %39 = arith.mulf %38, %13 : vector<32x128xf32>
    %40 = arith.subf %9, %39 : vector<32x128xf32>
    %cst_29 = arith.constant 5.000000e-01 : f32
    %41 = vector.broadcast %cst_29 : f32 to vector<32x128xf32>
    %42 = arith.mulf %41, %13 : vector<32x128xf32>
    %43 = arith.addf %9, %42 : vector<32x128xf32>
    %cst_30 = arith.constant 5.000000e-01 : f32
    %44 = vector.broadcast %cst_30 : f32 to vector<32x128xf32>
    %45 = arith.mulf %44, %15 : vector<32x128xf32>
    %46 = arith.subf %11, %45 : vector<32x128xf32>
    %cst_31 = arith.constant 5.000000e-01 : f32
    %47 = vector.broadcast %cst_31 : f32 to vector<32x128xf32>
    %48 = arith.mulf %47, %15 : vector<32x128xf32>
    %49 = arith.addf %11, %48 : vector<32x128xf32>
    %50 = arith.minimumf %31, %43 : vector<32x128xf32>
    %51 = arith.maximumf %28, %40 : vector<32x128xf32>
    %52 = arith.subf %50, %51 : vector<32x128xf32>
    %cst_32 = arith.constant 0.000000e+00 : f32
    %53 = vector.broadcast %cst_32 : f32 to vector<32x128xf32>
    %54 = arith.maximumf %52, %53 : vector<32x128xf32>
    %55 = arith.minimumf %37, %49 : vector<32x128xf32>
    %56 = arith.maximumf %34, %46 : vector<32x128xf32>
    %57 = arith.subf %55, %56 : vector<32x128xf32>
    %cst_33 = arith.constant 0.000000e+00 : f32
    %58 = vector.broadcast %cst_33 : f32 to vector<32x128xf32>
    %59 = arith.maximumf %57, %58 : vector<32x128xf32>
    %60 = arith.mulf %54, %59 : vector<32x128xf32>
    %61 = arith.mulf %5, %7 : vector<32x128xf32>
    %62 = arith.mulf %13, %15 : vector<32x128xf32>
    %63 = arith.addf %61, %62 : vector<32x128xf32>
    %64 = arith.subf %63, %60 : vector<32x128xf32>
    %cst_34 = arith.constant 9.99999971E-10 : f32
    %65 = vector.broadcast %cst_34 : f32 to vector<32x128xf32>
    %66 = arith.addf %64, %65 : vector<32x128xf32>
    %67 = arith.divf %60, %66 : vector<32x128xf32>
    %68 = arith.maximumf %31, %43 : vector<32x128xf32>
    %69 = arith.minimumf %28, %40 : vector<32x128xf32>
    %70 = arith.subf %68, %69 : vector<32x128xf32>
    %cst_35 = arith.constant 0.000000e+00 : f32
    %71 = vector.broadcast %cst_35 : f32 to vector<32x128xf32>
    %72 = arith.maximumf %70, %71 : vector<32x128xf32>
    %73 = arith.maximumf %37, %49 : vector<32x128xf32>
    %74 = arith.minimumf %34, %46 : vector<32x128xf32>
    %75 = arith.subf %73, %74 : vector<32x128xf32>
    %cst_36 = arith.constant 0.000000e+00 : f32
    %76 = vector.broadcast %cst_36 : f32 to vector<32x128xf32>
    %77 = arith.maximumf %75, %76 : vector<32x128xf32>
    %78 = arith.mulf %72, %77 : vector<32x128xf32>
    %79 = arith.subf %78, %64 : vector<32x128xf32>
    %cst_37 = arith.constant 9.99999971E-10 : f32
    %80 = vector.broadcast %cst_37 : f32 to vector<32x128xf32>
    %81 = arith.addf %78, %80 : vector<32x128xf32>
    %82 = arith.divf %79, %81 : vector<32x128xf32>
    %83 = arith.subf %67, %82 : vector<32x128xf32>
    %cst_38 = arith.constant 1.000000e+00 : f32
    %84 = vector.broadcast %cst_38 : f32 to vector<32x128xf32>
    %85 = arith.subf %84, %83 : vector<32x128xf32>
    %cst_39 = arith.constant 0.000000e+00 : f32
    %86 = vector.broadcast %cst_39 : f32 to vector<32x128xf32>
    %87 = arith.select %25, %85, %86 : vector<32x128xi1>, vector<32x128xf32>
    %cst_40 = arith.constant 0.000000e+00 : f32
    %88 = vector.broadcast %cst_40 : f32 to vector<32x128xf32>
    %c0_i32 = arith.constant 0 : i32
    %c4_i32 = arith.constant 4 : i32
    %89 = arith.addi %c0_i32, %c4_i32 : i32
    %c1_i32 = arith.constant 1 : i32
    %90 = scf.for %arg4 = %c0_i32 to %89 step %c1_i32 iter_args(%arg5 = %88) -> (vector<32x128xf32>)  : i32 {
      %148 = arith.index_cast %arg4 : i32 to index
      %c0_60 = arith.constant 0 : index
      %c0_61 = arith.constant 0 : index
      %149 = vector.load %arg2[%148, %c0_60, %c0_61] : memref<4x32x128xbf16, #tpu.memory_space<vmem>>, vector<1x32x128xbf16>
      %150 = vector.shape_cast %149 : vector<1x32x128xbf16> to vector<32x128xbf16>
      %151 = arith.extf %150 : vector<32x128xbf16> to vector<32x128xf32>
      %152 = arith.sitofp %arg4 : i32 to f32
      %153 = vector.broadcast %152 : f32 to vector<32x128xf32>
      %154 = arith.cmpf oeq, %23, %153 : vector<32x128xf32>
      %cst_62 = arith.constant 1.000000e+00 : f32
      %155 = vector.broadcast %cst_62 : f32 to vector<32x128xf32>
      %156 = arith.subf %155, %151 : vector<32x128xf32>
      %157 = arith.select %154, %151, %156 : vector<32x128xi1>, vector<32x128xf32>
      %cst_63 = arith.constant 1.000000e-07 : f32
      %cst_64 = arith.constant 0.99999988 : f32
      %158 = vector.broadcast %cst_63 : f32 to vector<32x128xf32>
      %159 = arith.maximumf %158, %157 : vector<32x128xf32>
      %160 = vector.broadcast %cst_64 : f32 to vector<32x128xf32>
      %161 = arith.minimumf %160, %159 : vector<32x128xf32>
      %162 = math.log %161 : vector<32x128xf32>
      %163 = arith.subf %arg5, %162 : vector<32x128xf32>
      scf.yield %163 : vector<32x128xf32>
    }
    %c4_i32_41 = arith.constant 4 : i32
    %cst_42 = arith.constant 0.000000e+00 : f32
    %91 = vector.broadcast %cst_42 : f32 to vector<32x128xf32>
    %92 = arith.select %25, %90, %91 : vector<32x128xi1>, vector<32x128xf32>
    %cst_43 = arith.constant 1.000000e+00 : f32
    %93 = vector.broadcast %cst_43 : f32 to vector<32x128xf32>
    %94 = arith.subf %93, %21 : vector<32x128xf32>
    %95 = arith.select %25, %21, %94 : vector<32x128xi1>, vector<32x128xf32>
    %cst_44 = arith.constant 1.000000e-07 : f32
    %cst_45 = arith.constant 0.99999988 : f32
    %96 = vector.broadcast %cst_44 : f32 to vector<32x128xf32>
    %97 = arith.maximumf %96, %95 : vector<32x128xf32>
    %98 = vector.broadcast %cst_45 : f32 to vector<32x128xf32>
    %99 = arith.minimumf %98, %97 : vector<32x128xf32>
    %100 = math.log %99 : vector<32x128xf32>
    %cst_46 = arith.constant 0.000000e+00 : f32
    %101 = vector.broadcast %cst_46 : f32 to vector<32x128xf32>
    %102 = arith.subf %101, %100 : vector<32x128xf32>
    %cst_47 = arith.constant 5.000000e-01 : f32
    %103 = vector.broadcast %cst_47 : f32 to vector<32x128xf32>
    %104 = arith.cmpf ogt, %19, %103 : vector<32x128xf32>
    %105 = arith.ori %104, %25 : vector<32x128xi1>
    %cst_48 = arith.constant 0.000000e+00 : f32
    %106 = vector.broadcast %cst_48 : f32 to vector<32x128xf32>
    %107 = arith.select %105, %102, %106 : vector<32x128xi1>, vector<32x128xf32>
    %108 = arith.extui %105 : vector<32x128xi1> to vector<32x128xi32>
    %109 = arith.sitofp %108 : vector<32x128xi32> to vector<32x128xf32>
    %110 = tpu.iota {dimensions = array<i32: 1>} : vector<32x128xi32>
    %c0_i32_49 = arith.constant 0 : i32
    %111 = vector.broadcast %c0_i32_49 : i32 to vector<32x128xi32>
    %112 = arith.cmpi eq, %110, %111 : vector<32x128xi32>
    %cst_50 = arith.constant dense<0.000000e+00> : vector<32xf32>
    %113 = vector.multi_reduction <add>, %87, %cst_50 [1] : vector<32x128xf32> to vector<32xf32>
    %114 = vector.shape_cast %113 : vector<32xf32> to vector<32x1xf32>
    %cst_51 = arith.constant 0.000000e+00 : f32
    %115 = vector.shape_cast %114 : vector<32x1xf32> to vector<32x1xf32>
    %116 = vector.broadcast %115 : vector<32x1xf32> to vector<32x128xf32>
    %117 = vector.broadcast %cst_51 : f32 to vector<32x128xf32>
    %118 = arith.select %112, %116, %117 : vector<32x128xi1>, vector<32x128xf32>
    %c1_i32_52 = arith.constant 1 : i32
    %119 = vector.broadcast %c1_i32_52 : i32 to vector<32x128xi32>
    %120 = arith.cmpi eq, %110, %119 : vector<32x128xi32>
    %cst_53 = arith.constant dense<0.000000e+00> : vector<32xf32>
    %121 = vector.multi_reduction <add>, %17, %cst_53 [1] : vector<32x128xf32> to vector<32xf32>
    %122 = vector.shape_cast %121 : vector<32xf32> to vector<32x1xf32>
    %123 = vector.shape_cast %122 : vector<32x1xf32> to vector<32x1xf32>
    %124 = vector.broadcast %123 : vector<32x1xf32> to vector<32x128xf32>
    %125 = arith.select %120, %124, %118 : vector<32x128xi1>, vector<32x128xf32>
    %c2_i32 = arith.constant 2 : i32
    %126 = vector.broadcast %c2_i32 : i32 to vector<32x128xi32>
    %127 = arith.cmpi eq, %110, %126 : vector<32x128xi32>
    %cst_54 = arith.constant dense<0.000000e+00> : vector<32xf32>
    %128 = vector.multi_reduction <add>, %92, %cst_54 [1] : vector<32x128xf32> to vector<32xf32>
    %129 = vector.shape_cast %128 : vector<32xf32> to vector<32x1xf32>
    %130 = vector.shape_cast %129 : vector<32x1xf32> to vector<32x1xf32>
    %131 = vector.broadcast %130 : vector<32x1xf32> to vector<32x128xf32>
    %132 = arith.select %127, %131, %125 : vector<32x128xi1>, vector<32x128xf32>
    %c3_i32 = arith.constant 3 : i32
    %133 = vector.broadcast %c3_i32 : i32 to vector<32x128xi32>
    %134 = arith.cmpi eq, %110, %133 : vector<32x128xi32>
    %cst_55 = arith.constant dense<0.000000e+00> : vector<32xf32>
    %135 = vector.multi_reduction <add>, %107, %cst_55 [1] : vector<32x128xf32> to vector<32xf32>
    %136 = vector.shape_cast %135 : vector<32xf32> to vector<32x1xf32>
    %137 = vector.shape_cast %136 : vector<32x1xf32> to vector<32x1xf32>
    %138 = vector.broadcast %137 : vector<32x1xf32> to vector<32x128xf32>
    %139 = arith.select %134, %138, %132 : vector<32x128xi1>, vector<32x128xf32>
    %c4_i32_56 = arith.constant 4 : i32
    %140 = vector.broadcast %c4_i32_56 : i32 to vector<32x128xi32>
    %141 = arith.cmpi eq, %110, %140 : vector<32x128xi32>
    %cst_57 = arith.constant dense<0.000000e+00> : vector<32xf32>
    %142 = vector.multi_reduction <add>, %109, %cst_57 [1] : vector<32x128xf32> to vector<32xf32>
    %143 = vector.shape_cast %142 : vector<32xf32> to vector<32x1xf32>
    %144 = vector.shape_cast %143 : vector<32x1xf32> to vector<32x1xf32>
    %145 = vector.broadcast %144 : vector<32x1xf32> to vector<32x128xf32>
    %146 = arith.select %141, %145, %139 : vector<32x128xi1>, vector<32x128xf32>
    %c0_58 = arith.constant 0 : index
    %c0_59 = arith.constant 0 : index
    %147 = vector.load %arg3[%c0_58, %c0_59] : memref<32x128xf32, #tpu.memory_space<vmem>>, vector<32x128xf32>
    tpu.vector_store %arg3[%c0_58, %c0_59], %146 {strides = array<i32>} : memref<32x128xf32, #tpu.memory_space<vmem>>, vector<32x128xf32>,
    return
  }
  func.func @transform_0(%arg0: i32) -> (i32, i32, i32) {
    %c0_i32 = arith.constant 0 : i32
    %c0_i32_0 = arith.constant 0 : i32
    %c0_i32_1 = arith.constant 0 : i32
    return %c0_i32, %arg0, %c0_i32_0 : i32, i32, i32
  }
  func.func @transform_1(%arg0: i32) -> (i32, i32, i32) {
    %c0_i32 = arith.constant 0 : i32
    %c0_i32_0 = arith.constant 0 : i32
    %c0_i32_1 = arith.constant 0 : i32
    return %c0_i32, %arg0, %c0_i32_0 : i32, i32, i32
  }
  func.func @transform_2(%arg0: i32) -> (i32, i32) {
    %c0_i32 = arith.constant 0 : i32
    %c0_i32_0 = arith.constant 0 : i32
    return %arg0, %c0_i32 : i32, i32
  }
}

</mosaic_0001>

<llo_original>
// kernel: squeeze.122
$region0: #{squeeze.122}
  %s0 = inlined_call_operand.vmem [shape: f32[2,3,8,8], index: 0, kind: input, shape index: {}]
  %s1 = inlined_call_operand.vmem [shape: f32[1,384], index: 1, kind: output, shape index: {}]
  $region1: #{squeeze.122} parent=0
    #allocation0 [shape = 'u8[12288]{0}', space=vmem, size = 0x3000, scoped, tag = 'scoped mem for output reshape']
    %s2 = smov 3
    %v3 = vld [vmem:[%s0] ss:$16 sm:%s2]
    %s4 = scalar_lea.vmem %s0, 30
    %v5 = vld [vmem:[%s4] sm:$0x4]
    %vm6 = vcmask 1042434
    %v7 = vsel %vm6, %v5, %v3
    %vm8 = vcmask 64512
    %9 = vst.msk [vmem:[#allocation0] ss:$8 sm:$0x7] %vm8, %v7
    %s10 = scalar_lea.vmem %s0, 15
    %s11 = smov 3
    %v12 = vld [vmem:[%s10] ss:$16 sm:%s11]
    %s13 = scalar_lea.vmem %s0, 45
    %v14 = vld [vmem:[%s13] sm:$0x4]
    %vm15 = vcmask 1042434
    %v16 = vsel %vm15, %v14, %v12
    %17 = vrot.lane.b32.xlu0 %v16, 120
    %v18 = vpop.permute.xlu0 %17
    %vm19 = vcmask 1048512
    %20 = vst.msk [vmem:[#allocation0] ss:$8 sm:$0x7] %vm19, %v18
    %s21 = scalar_lea.vmem %s0, 14
    %s22 = smov 3
    %v23 = vld [vmem:[%s21] ss:$16 sm:%s22]
    %s24 = scalar_lea.vmem %s0, 44
    %v25 = vld [vmem:[%s24] sm:$0x4]
    %vm26 = vcmask 1042434
    %v27 = vsel %vm26, %v25, %v23
    %28 = vrot.lane.b32.xlu0 %v27, 112
    %v29 = vpop.permute.xlu0 %28
    %vm30 = vcmask 982912
    %31 = vst.msk [vmem:[#allocation0] ss:$8 sm:$0x7] %vm30, %v29
    %s32 = scalar_lea.vmem %s0, 13
    %s33 = smov 3
    %v34 = vld [vmem:[%s32] ss:$16 sm:%s33]
    %s35 = scalar_lea.vmem %s0, 43
    %v36 = vld [vmem:[%s35] sm:$0x4]
    %vm37 = vcmask 1042434
    %v38 = vsel %vm37, %v36, %v34
    %39 = vrot.lane.b32.xlu0 %v38, 104
    %v40 = vpop.permute.xlu0 %39
    %vm41 = vcmask 917312
    %42 = vst.msk [vmem:[#allocation0] ss:$8 sm:$0x7] %vm41, %v40
    %s43 = scalar_lea.vmem %s0, 12
    %s44 = smov 3
    %v45 = vld [vmem:[%s43] ss:$16 sm:%s44]
    %s46 = scalar_lea.vmem %s0, 42
    %v47 = vld [vmem:[%s46] sm:$0x4]
    %vm48 = vcmask 1042434
    %v49 = vsel %vm48, %v47, %v45
    %50 = vrot.lane.b32.xlu0 %v49, 96
    %v51 = vpop.permute.xlu0 %50
    %vm52 = vcmask 851712
    %53 = vst.msk [vmem:[#allocation0] ss:$8 sm:$0x7] %vm52, %v51
    %s54 = scalar_lea.vmem %s0, 11
    %s55 = smov 3
    %v56 = vld [vmem:[%s54] ss:$16 sm:%s55]
    %s57 = scalar_lea.vmem %s0, 41
    %v58 = vld [vmem:[%s57] sm:$0x4]
    %vm59 = vcmask 1042434
    %v60 = vsel %vm59, %v58, %v56
    %61 = vrot.lane.b32.xlu0 %v60, 88
    %v62 = vpop.permute.xlu0 %61
    %vm63 = vcmask 786112
    %64 = vst.msk [vmem:[#allocation0] ss:$8 sm:$0x7] %vm63, %v62
    %s65 = scalar_lea.vmem %s0, 10
    %s66 = smov 3
    %v67 = vld [vmem:[%s65] ss:$16 sm:%s66]
    %s68 = scalar_lea.vmem %s0, 40
    %v69 = vld [vmem:[%s68] sm:$0x4]
    %vm70 = vcmask 1042434
    %v71 = vsel %vm70, %v69, %v67
    %72 = vrot.lane.b32.xlu0 %v71, 80
    %v73 = vpop.permute.xlu0 %72
    %vm74 = vcmask 720512
    %75 = vst.msk [vmem:[#allocation0] ss:$8 sm:$0x7] %vm74, %v73
    %s76 = scalar_lea.vmem %s0, 9
    %s77 = smov 3
    %v78 = vld [vmem:[%s76] ss:$16 sm:%s77]
    %s79 = scalar_lea.vmem %s0, 39
    %v80 = vld [vmem:[%s79] sm:$0x4]
    %vm81 = vcmask 1042434
    %v82 = vsel %vm81, %v80, %v78
    %83 = vrot.lane.b32.xlu0 %v82, 72
    %v84 = vpop.permute.xlu0 %83
    %vm85 = vcmask 654912
    %86 = vst.msk [vmem:[#allocation0] ss:$8 sm:$0x7] %vm85, %v84
    %s87 = scalar_lea.vmem %s0, 8
    %s88 = smov 3
    %v89 = vld [vmem:[%s87] ss:$16 sm:%s88]
    %s90 = scalar_lea.vmem %s0, 38
    %v91 = vld [vmem:[%s90] sm:$0x4]
    %vm92 = vcmask 1042434
    %v93 = vsel %vm92, %v91, %v89
    %94 = vrot.lane.b32.xlu0 %v93, 64
    %v95 = vpop.permute.xlu0 %94
    %vm96 = vcmask 589312
    %97 = vst.msk [vmem:[#allocation0] ss:$8 sm:$0x7] %vm96, %v95
    %s98 = scalar_lea.vmem %s0, 7
    %s99 = smov 3
    %v100 = vld [vmem:[%s98] ss:$16 sm:%s99]
    %s101 = scalar_lea.vmem %s0, 37
    %v102 = vld [vmem:[%s101] sm:$0x4]
    %vm103 = vcmask 1042434
    %v104 = vsel %vm103, %v102, %v100
    %105 = vrot.lane.b32.xlu0 %v104, 56
    %v106 = vpop.permute.xlu0 %105
    %vm107 = vcmask 523712
    %108 = vst.msk [vmem:[#allocation0] ss:$8 sm:$0x7] %vm107, %v106
    %s109 = scalar_lea.vmem %s0, 6
    %s110 = smov 3
    %v111 = vld [vmem:[%s109] ss:$16 sm:%s110]
    %s112 = scalar_lea.vmem %s0, 36
    %v113 = vld [vmem:[%s112] sm:$0x4]
    %vm114 = vcmask 1042434
    %v115 = vsel %vm114, %v113, %v111
    %116 = vrot.lane.b32.xlu0 %v115, 48
    %v117 = vpop.permute.xlu0 %116
    %vm118 = vcmask 458112
    %119 = vst.msk [vmem:[#allocation0] ss:$8 sm:$0x7] %vm118, %v117
    %s120 = scalar_lea.vmem %s0, 5
    %s121 = smov 3
    %v122 = vld [vmem:[%s120] ss:$16 sm:%s121]
    %s123 = scalar_lea.vmem %s0, 35
    %v124 = vld [vmem:[%s123] sm:$0x4]
    %vm125 = vcmask 1042434
    %v126 = vsel %vm125, %v124, %v122
    %127 = vrot.lane.b32.xlu0 %v126, 40
    %v128 = vpop.permute.xlu0 %127
    %vm129 = vcmask 392512
    %130 = vst.msk [vmem:[#allocation0] ss:$8 sm:$0x7] %vm129, %v128
    %s131 = scalar_lea.vmem %s0, 4
    %s132 = smov 3
    %v133 = vld [vmem:[%s131] ss:$16 sm:%s132]
    %s134 = scalar_lea.vmem %s0, 34
    %v135 = vld [vmem:[%s134] sm:$0x4]
    %vm136 = vcmask 1042434
    %v137 = vsel %vm136, %v135, %v133
    %138 = vrot.lane.b32.xlu0 %v137, 32
    %v139 = vpop.permute.xlu0 %138
    %vm140 = vcmask 326912
    %141 = vst.msk [vmem:[#allocation0] ss:$8 sm:$0x7] %vm140, %v139
    %s142 = scalar_lea.vmem %s0, 3
    %s143 = smov 3
    %v144 = vld [vmem:[%s142] ss:$16 sm:%s143]
    %s145 = scalar_lea.vmem %s0, 33
    %v146 = vld [vmem:[%s145] sm:$0x4]
    %vm147 = vcmask 1042434
    %v148 = vsel %vm147, %v146, %v144
    %149 = vrot.lane.b32.xlu0 %v148, 24
    %v150 = vpop.permute.xlu0 %149
    %vm151 = vcmask 261312
    %152 = vst.msk [vmem:[#allocation0] ss:$8 sm:$0x7] %vm151, %v150
    %s153 = scalar_lea.vmem %s0, 2
    %s154 = smov 3
    %v155 = vld [vmem:[%s153] ss:$16 sm:%s154]
    %s156 = scalar_lea.vmem %s0, 32
    %v157 = vld [vmem:[%s156] sm:$0x4]
    %vm158 = vcmask 1042434
    %v159 = vsel %vm158, %v157, %v155
    %160 = vrot.lane.b32.xlu0 %v159, 16
    %v161 = vpop.permute.xlu0 %160
    %vm162 = vcmask 195712
    %163 = vst.msk [vmem:[#allocation0] ss:$8 sm:$0x7] %vm162, %v161
    %s164 = scalar_lea.vmem %s0, 1
    %s165 = smov 3
    %v166 = vld [vmem:[%s164] ss:$16 sm:%s165]
    %s167 = scalar_lea.vmem %s0, 31
    %v168 = vld [vmem:[%s167] sm:$0x4]
    %vm169 = vcmask 1042434
    %v170 = vsel %vm169, %v168, %v166
    %171 = vrot.lane.b32.xlu0 %v170, 8
    %v172 = vpop.permute.xlu0 %171
    %vm173 = vcmask 130112
    %174 = vst.msk [vmem:[#allocation0] ss:$8 sm:$0x7] %vm173, %v172
    %s176 = sshllo.u32 0, 1
    %v178 = vld [vmem:[#allocation0] sm:%s176]
    %s179 = sshllo.u32 0, 1
    %180 = vst [vmem:[%s1] sm:%s179] %v178
    %s181 = scalar_lea.vmem [#allocation0], 8
    %v182 = vld [vmem:[%s181] sm:%s176]
    %s183 = sshllo.u32 0, 1
    %s184 = scalar_lea.vmem %s1, 1
    %185 = vst [vmem:[%s184] sm:%s183] %v182
    %s186 = scalar_lea.vmem [#allocation0], 16
    %v187 = vld [vmem:[%s186] sm:%s176]
    %s188 = sshllo.u32 0, 1
    %s189 = smul.addr 1, 2
    %s190 = scalar_lea.vmem %s1, %s189
    %191 = vst [vmem:[%s190] sm:%s188] %v187

// kernel: squeeze.149
$region0: #{squeeze.149}
  %s0 = inlined_call_operand.vmem [shape: f32[2,3,16,16,1], index: 0, kind: input, shape index: {}]
  %s1 = inlined_call_operand.vmem [shape: f32[1,1536], index: 1, kind: output, shape index: {}]
  $region1: #{squeeze.149} parent=0
    #allocation0 [shape = 'u8[49152]{0}', space=vmem, size = 0xc000, scoped, tag = 'scoped mem for output reshape']
    %v2 = vld [vmem:[%s0] ss:$8 sm:$0xf]
    %v3 = vld [vmem:[%s0] ss:$8 sm:$0xf0]
    %vm4 = vcmask 1047556
    %v5 = vsel %vm4, %v3, %v2
    %vm6 = vcmask 130048
    %7 = vst.msk [vmem:[#allocation0] ss:$8 sm:$0xf] %vm6, %v5
    %8 = vst.msk [vmem:[#allocation0] ss:$8 sm:$0xf0] %vm6, %v5
    %s9 = scalar_lea.vmem %s0, 64
    %v10 = vld [vmem:[%s9] ss:$8 sm:$0xf]
    %vm11 = vcmask 130048
    %s12 = scalar_lea.vmem [#allocation0], 64
    %13 = vst.msk [vmem:[%s12] ss:$8 sm:$0xf] %vm11, %v10
    %s14 = scalar_lea.vmem %s0, 7
    %v15 = vld [vmem:[%s14] ss:$8 sm:$0xf]
    %s16 = scalar_lea.vmem %s0, 7
    %v17 = vld [vmem:[%s16] ss:$8 sm:$0xf0]
    %vm18 = vcmask 1047556
    %v19 = vsel %vm18, %v17, %v15
    %20 = vrot.lane.b32.xlu0 %v19, 112
    %v21 = vpop.permute.xlu0 %20
    %vm22 = vcmask 1048448
    %23 = vst.msk [vmem:[#allocation0] ss:$8 sm:$0xf] %vm22, %v21
    %24 = vst.msk [vmem:[#allocation0] ss:$8 sm:$0xf0] %vm22, %v21
    %s25 = scalar_lea.vmem %s0, 71
    %v26 = vld [vmem:[%s25] ss:$8 sm:$0xf]
    %27 = vrot.lane.b32.xlu0 %v26, 112
    %v28 = vpop.permute.xlu0 %27
    %vm29 = vcmask 1048448
    %s30 = scalar_lea.vmem [#allocation0], 64
    %31 = vst.msk [vmem:[%s30] ss:$8 sm:$0xf] %vm29, %v28
    %s32 = scalar_lea.vmem %s0, 6
    %v33 = vld [vmem:[%s32] ss:$8 sm:$0xf]
    %s34 = scalar_lea.vmem %s0, 6
    %v35 = vld [vmem:[%s34] ss:$8 sm:$0xf0]
    %vm36 = vcmask 1047556
    %v37 = vsel %vm36, %v35, %v33
    %38 = vrot.lane.b32.xlu0 %v37, 96
    %v39 = vpop.permute.xlu0 %38
    %vm40 = vcmask 917248
    %41 = vst.msk [vmem:[#allocation0] ss:$8 sm:$0xf] %vm40, %v39
    %42 = vst.msk [vmem:[#allocation0] ss:$8 sm:$0xf0] %vm40, %v39
    %s43 = scalar_lea.vmem %s0, 70
    %v44 = vld [vmem:[%s43] ss:$8 sm:$0xf]
    %45 = vrot.lane.b32.xlu0 %v44, 96
    %v46 = vpop.permute.xlu0 %45
    %vm47 = vcmask 917248
    %s48 = scalar_lea.vmem [#allocation0], 64
    %49 = vst.msk [vmem:[%s48] ss:$8 sm:$0xf] %vm47, %v46
    %s50 = scalar_lea.vmem %s0, 5
    %v51 = vld [vmem:[%s50] ss:$8 sm:$0xf]
    %s52 = scalar_lea.vmem %s0, 5
    %v53 = vld [vmem:[%s52] ss:$8 sm:$0xf0]
    %vm54 = vcmask 1047556
    %v55 = vsel %vm54, %v53, %v51
    %56 = vrot.lane.b32.xlu0 %v55, 80
    %v57 = vpop.permute.xlu0 %56
    %vm58 = vcmask 786048
    %59 = vst.msk [vmem:[#allocation0] ss:$8 sm:$0xf] %vm58, %v57
    %60 = vst.msk [vmem:[#allocation0] ss:$8 sm:$0xf0] %vm58, %v57
    %s61 = scalar_lea.vmem %s0, 69
    %v62 = vld [vmem:[%s61] ss:$8 sm:$0xf]
    %63 = vrot.lane.b32.xlu0 %v62, 80
    %v64 = vpop.permute.xlu0 %63
    %vm65 = vcmask 786048
    %s66 = scalar_lea.vmem [#allocation0], 64
    %67 = vst.msk [vmem:[%s66] ss:$8 sm:$0xf] %vm65, %v64
    %s68 = scalar_lea.vmem %s0, 4
    %v69 = vld [vmem:[%s68] ss:$8 sm:$0xf]
    %s70 = scalar_lea.vmem %s0, 4
    %v71 = vld [vmem:[%s70] ss:$8 sm:$0xf0]
    %vm72 = vcmask 1047556
    %v73 = vsel %vm72, %v71, %v69
    %74 = vrot.lane.b32.xlu0 %v73, 64
    %v75 = vpop.permute.xlu0 %74
    %vm76 = vcmask 654848
    %77 = vst.msk [vmem:[#allocation0] ss:$8 sm:$0xf] %vm76, %v75
    %78 = vst.msk [vmem:[#allocation0] ss:$8 sm:$0xf0] %vm76, %v75
    %s79 = scalar_lea.vmem %s0, 68
    %v80 = vld [vmem:[%s79] ss:$8 sm:$0xf]
    %81 = vrot.lane.b32.xlu0 %v80, 64
    %v82 = vpop.permute.xlu0 %81
    %vm83 = vcmask 654848
    %s84 = scalar_lea.vmem [#allocation0], 64
    %85 = vst.msk [vmem:[%s84] ss:$8 sm:$0xf] %vm83, %v82
    %s86 = scalar_lea.vmem %s0, 3
    %v87 = vld [vmem:[%s86] ss:$8 sm:$0xf]
    %s88 = scalar_lea.vmem %s0, 3
    %v89 = vld [vmem:[%s88] ss:$8 sm:$0xf0]
    %vm90 = vcmask 1047556
    %v91 = vsel %vm90, %v89, %v87
    %92 = vrot.lane.b32.xlu0 %v91, 48
    %v93 = vpop.permute.xlu0 %92
    %vm94 = vcmask 523648
    %95 = vst.msk [vmem:[#allocation0] ss:$8 sm:$0xf] %vm94, %v93
    %96 = vst.msk [vmem:[#allocation0] ss:$8 sm:$0xf0] %vm94, %v93
    %s97 = scalar_lea.vmem %s0, 67
    %v98 = vld [vmem:[%s97] ss:$8 sm:$0xf]
    %99 = vrot.lane.b32.xlu0 %v98, 48
    %v100 = vpop.permute.xlu0 %99
    %vm101 = vcmask 523648
    %s102 = scalar_lea.vmem [#allocation0], 64
    %103 = vst.msk [vmem:[%s102] ss:$8 sm:$0xf] %vm101, %v100
    %s104 = scalar_lea.vmem %s0, 2
    %v105 = vld [vmem:[%s104] ss:$8 sm:$0xf]
    %s106 = scalar_lea.vmem %s0, 2
    %v107 = vld [vmem:[%s106] ss:$8 sm:$0xf0]
    %vm108 = vcmask 1047556
    %v109 = vsel %vm108, %v107, %v105
    %110 = vrot.lane.b32.xlu0 %v109, 32
    %v111 = vpop.permute.xlu0 %110
    %vm112 = vcmask 392448
    %113 = vst.msk [vmem:[#allocation0] ss:$8 sm:$0xf] %vm112, %v111
    %114 = vst.msk [vmem:[#allocation0] ss:$8 sm:$0xf0] %vm112, %v111
    %s115 = scalar_lea.vmem %s0, 66
    %v116 = vld [vmem:[%s115] ss:$8 sm:$0xf]
    %117 = vrot.lane.b32.xlu0 %v116, 32
    %v118 = vpop.permute.xlu0 %117
    %vm119 = vcmask 392448
    %s120 = scalar_lea.vmem [#allocation0], 64
    %121 = vst.msk [vmem:[%s120] ss:$8 sm:$0xf] %vm119, %v118
    %s122 = scalar_lea.vmem %s0, 1
    %v123 = vld [vmem:[%s122] ss:$8 sm:$0xf]
    %s124 = scalar_lea.vmem %s0, 1
    %v125 = vld [vmem:[%s124] ss:$8 sm:$0xf0]
    %vm126 = vcmask 1047556
    %v127 = vsel %vm126, %v125, %v123
    %128 = vrot.lane.b32.xlu0 %v127, 16
    %v129 = vpop.permute.xlu0 %128
    %vm130 = vcmask 261248
    %131 = vst.msk [vmem:[#allocation0] ss:$8 sm:$0xf] %vm130, %v129
    %132 = vst.msk [vmem:[#allocation0] ss:$8 sm:$0xf0] %vm130, %v129
    %s133 = scalar_lea.vmem %s0, 65
    %v134 = vld [vmem:[%s133] ss:$8 sm:$0xf]
    %135 = vrot.lane.b32.xlu0 %v134, 16
    %v136 = vpop.permute.xlu0 %135
    %vm137 = vcmask 261248
    %s138 = scalar_lea.vmem [#allocation0], 64
    %139 = vst.msk [vmem:[%s138] ss:$8 sm:$0xf] %vm137, %v136
    %s141 = sshllo.u32 0, 1
    %v143 = vld [vmem:[#allocation0] sm:%s141]
    %s144 = sshllo.u32 0, 1
    %145 = vst [vmem:[%s1] sm:%s144] %v143
    %s146 = scalar_lea.vmem [#allocation0], 8
    %v147 = vld [vmem:[%s146] sm:%s141]
    %s148 = sshllo.u32 0, 1
    %s149 = scalar_lea.vmem %s1, 1
    %150 = vst [vmem:[%s149] sm:%s148] %v147
    %s151 = scalar_lea.vmem [#allocation0], 16
    %v152 = vld [vmem:[%s151] sm:%s141]
    %s153 = sshllo.u32 0, 1
    %s154 = smul.addr 1, 2
    %s155 = scalar_lea.vmem %s1, %s154
    %156 = vst [vmem:[%s155] sm:%s153] %v152
    %s157 = scalar_lea.vmem [#allocation0], 24
    %v158 = vld [vmem:[%s157] sm:%s141]
    %s159 = sshllo.u32 0, 1
    %s160 = smul.addr 1, 3
    %s161 = scalar_lea.vmem %s1, %s160
    %162 = vst [vmem:[%s161] sm:%s159] %v158
    %s163 = scalar_lea.vmem [#allocation0], 32
    %v164 = vld [vmem:[%s163] sm:%s141]
    %s165 = sshllo.u32 0, 1
    %s166 = smul.addr 1, 4
    %s167 = scalar_lea.vmem %s1, %s166
    %168 = vst [vmem:[%s167] sm:%s165] %v164
    %s169 = scalar_lea.vmem [#allocation0], 40
    %v170 = vld [vmem:[%s169] sm:%s141]
    %s171 = sshllo.u32 0, 1
    %s172 = smul.addr 1, 5
    %s173 = scalar_lea.vmem %s1, %s172
    %174 = vst [vmem:[%s173] sm:%s171] %v170
    %s175 = scalar_lea.vmem [#allocation0], 48
    %v176 = vld [vmem:[%s175] sm:%s141]
    %s177 = sshllo.u32 0, 1
    %s178 = smul.addr 1, 6
    %s179 = scalar_lea.vmem %s1, %s178
    %180 = vst [vmem:[%s179] sm:%s177] %v176
    %s181 = scalar_lea.vmem [#allocation0], 56
    %v182 = vld [vmem:[%s181] sm:%s141]
    %s183 = sshllo.u32 0, 1
    %s184 = smul.addr 1, 7
    %s185 = scalar_lea.vmem %s1, %s184
    %186 = vst [vmem:[%s185] sm:%s183] %v182
    %s187 = scalar_lea.vmem [#allocation0], 64
    %v188 = vld [vmem:[%s187] sm:%s141]
    %s189 = sshllo.u32 0, 1
    %s190 = smul.addr 1, 8
    %s191 = scalar_lea.vmem %s1, %s190
    %192 = vst [vmem:[%s191] sm:%s189] %v188
    %s193 = scalar_lea.vmem [#allocation0], 72
    %v194 = vld [vmem:[%s193] sm:%s141]
    %s195 = sshllo.u32 0, 1
    %s196 = smul.addr 1, 9
    %s197 = scalar_lea.vmem %s1, %s196
    %198 = vst [vmem:[%s197] sm:%s195] %v194
    %s199 = scalar_lea.vmem [#allocation0], 80
    %v200 = vld [vmem:[%s199] sm:%s141]
    %s201 = sshllo.u32 0, 1
    %s202 = smul.addr 1, 10
    %s203 = scalar_lea.vmem %s1, %s202
    %204 = vst [vmem:[%s203] sm:%s201] %v200
    %s205 = scalar_lea.vmem [#allocation0], 88
    %v206 = vld [vmem:[%s205] sm:%s141]
    %s207 = sshllo.u32 0, 1
    %s208 = smul.addr 1, 11
    %s209 = scalar_lea.vmem %s1, %s208
    %210 = vst [vmem:[%s209] sm:%s207] %v206

// kernel: squeeze.176
$region0: #{squeeze.176}
  %s0 = inlined_call_operand.vmem [shape: f32[2,3,32,32,1], index: 0, kind: input, shape index: {}]
  %s1 = inlined_call_operand.vmem [shape: f32[1,6144], index: 1, kind: output, shape index: {}]
  $region1: #{squeeze.176} parent=0
    #allocation0 [shape = 'u8[196608]{0}', space=vmem, size = 0x30000, scoped, tag = 'scoped mem for output reshape']
    %v2 = vld [vmem:[%s0] ss:$4 sm:$0xff]
    %vm3 = vcmask 261120
    %4 = vst.msk [vmem:[#allocation0] ss:$8 sm:$0xf] %vm3, %v2
    %5 = vst.msk [vmem:[#allocation0] ss:$8 sm:$0xf0] %vm3, %v2
    %s6 = scalar_lea.vmem %s0, 32
    %v7 = vld [vmem:[%s6] ss:$4 sm:$0xff]
    %vm8 = vcmask 261120
    %s9 = scalar_lea.vmem [#allocation0], 64
    %10 = vst.msk [vmem:[%s9] ss:$8 sm:$0xf] %vm8, %v7
    %s11 = scalar_lea.vmem [#allocation0], 64
    %12 = vst.msk [vmem:[%s11] ss:$8 sm:$0xf0] %vm8, %v7
    %s13 = scalar_lea.vmem %s0, 64
    %v14 = vld [vmem:[%s13] ss:$4 sm:$0xff]
    %vm15 = vcmask 261120
    %s16 = scalar_lea.vmem [#allocation0], 128
    %17 = vst.msk [vmem:[%s16] ss:$8 sm:$0xf] %vm15, %v14
    %s18 = scalar_lea.vmem [#allocation0], 128
    %19 = vst.msk [vmem:[%s18] ss:$8 sm:$0xf0] %vm15, %v14
    %s20 = scalar_lea.vmem %s0, 96
    %v21 = vld [vmem:[%s20] ss:$4 sm:$0xff]
    %vm22 = vcmask 261120
    %s23 = scalar_lea.vmem [#allocation0], 192
    %24 = vst.msk [vmem:[%s23] ss:$8 sm:$0xf] %vm22, %v21
    %s25 = scalar_lea.vmem [#allocation0], 192
    %26 = vst.msk [vmem:[%s25] ss:$8 sm:$0xf0] %vm22, %v21
    %s27 = scalar_lea.vmem %s0, 128
    %v28 = vld [vmem:[%s27] ss:$4 sm:$0xff]
    %vm29 = vcmask 261120
    %s30 = scalar_lea.vmem [#allocation0], 256
    %31 = vst.msk [vmem:[%s30] ss:$8 sm:$0xf] %vm29, %v28
    %s32 = scalar_lea.vmem [#allocation0], 256
    %33 = vst.msk [vmem:[%s32] ss:$8 sm:$0xf0] %vm29, %v28
    %s34 = scalar_lea.vmem %s0, 160
    %v35 = vld [vmem:[%s34] ss:$4 sm:$0xff]
    %vm36 = vcmask 261120
    %s37 = scalar_lea.vmem [#allocation0], 320
    %38 = vst.msk [vmem:[%s37] ss:$8 sm:$0xf] %vm36, %v35
    %s39 = scalar_lea.vmem [#allocation0], 320
    %40 = vst.msk [vmem:[%s39] ss:$8 sm:$0xf0] %vm36, %v35
    %s41 = scalar_lea.vmem %s0, 3
    %v42 = vld [vmem:[%s41] ss:$4 sm:$0xff]
    %43 = vrot.lane.b32.xlu0 %v42, 96
    %v44 = vpop.permute.xlu0 %43
    %vm45 = vcmask 1048320
    %46 = vst.msk [vmem:[#allocation0] ss:$8 sm:$0xf] %vm45, %v44
    %47 = vst.msk [vmem:[#allocation0] ss:$8 sm:$0xf0] %vm45, %v44
    %s48 = scalar_lea.vmem %s0, 35
    %v49 = vld [vmem:[%s48] ss:$4 sm:$0xff]
    %50 = vrot.lane.b32.xlu0 %v49, 96
    %v51 = vpop.permute.xlu0 %50
    %vm52 = vcmask 1048320
    %s53 = scalar_lea.vmem [#allocation0], 64
    %54 = vst.msk [vmem:[%s53] ss:$8 sm:$0xf] %vm52, %v51
    %s55 = scalar_lea.vmem [#allocation0], 64
    %56 = vst.msk [vmem:[%s55] ss:$8 sm:$0xf0] %vm52, %v51
    %s57 = scalar_lea.vmem %s0, 67
    %v58 = vld [vmem:[%s57] ss:$4 sm:$0xff]
    %59 = vrot.lane.b32.xlu0 %v58, 96
    %v60 = vpop.permute.xlu0 %59
    %vm61 = vcmask 1048320
    %s62 = scalar_lea.vmem [#allocation0], 128
    %63 = vst.msk [vmem:[%s62] ss:$8 sm:$0xf] %vm61, %v60
    %s64 = scalar_lea.vmem [#allocation0], 128
    %65 = vst.msk [vmem:[%s64] ss:$8 sm:$0xf0] %vm61, %v60
    %s66 = scalar_lea.vmem %s0, 99
    %v67 = vld [vmem:[%s66] ss:$4 sm:$0xff]
    %68 = vrot.lane.b32.xlu0 %v67, 96
    %v69 = vpop.permute.xlu0 %68
    %vm70 = vcmask 1048320
    %s71 = scalar_lea.vmem [#allocation0], 192
    %72 = vst.msk [vmem:[%s71] ss:$8 sm:$0xf] %vm70, %v69
    %s73 = scalar_lea.vmem [#allocation0], 192
    %74 = vst.msk [vmem:[%s73] ss:$8 sm:$0xf0] %vm70, %v69
    %s75 = scalar_lea.vmem %s0, 131
    %v76 = vld [vmem:[%s75] ss:$4 sm:$0xff]
    %77 = vrot.lane.b32.xlu0 %v76, 96
    %v78 = vpop.permute.xlu0 %77
    %vm79 = vcmask 1048320
    %s80 = scalar_lea.vmem [#allocation0], 256
    %81 = vst.msk [vmem:[%s80] ss:$8 sm:$0xf] %vm79, %v78
    %s82 = scalar_lea.vmem [#allocation0], 256
    %83 = vst.msk [vmem:[%s82] ss:$8 sm:$0xf0] %vm79, %v78
    %s84 = scalar_lea.vmem %s0, 163
    %v85 = vld [vmem:[%s84] ss:$4 sm:$0xff]
    %86 = vrot.lane.b32.xlu0 %v85, 96
    %v87 = vpop.permute.xlu0 %86
    %vm88 = vcmask 1048320
    %s89 = scalar_lea.vmem [#allocation0], 320
    %90 = vst.msk [vmem:[%s89] ss:$8 sm:$0xf] %vm88, %v87
    %s91 = scalar_lea.vmem [#allocation0], 320
    %92 = vst.msk [vmem:[%s91] ss:$8 sm:$0xf0] %vm88, %v87
    %s93 = scalar_lea.vmem %s0, 2
    %v94 = vld [vmem:[%s93] ss:$4 sm:$0xff]
    %95 = vrot.lane.b32.xlu0 %v94, 64
    %v96 = vpop.permute.xlu0 %95
    %vm97 = vcmask 785920
    %98 = vst.msk [vmem:[#allocation0] ss:$8 sm:$0xf] %vm97, %v96
    %99 = vst.msk [vmem:[#allocation0] ss:$8 sm:$0xf0] %vm97, %v96
    %s100 = scalar_lea.vmem %s0, 34
    %v101 = vld [vmem:[%s100] ss:$4 sm:$0xff]
    %102 = vrot.lane.b32.xlu0 %v101, 64
    %v103 = vpop.permute.xlu0 %102
    %vm104 = vcmask 785920
    %s105 = scalar_lea.vmem [#allocation0], 64
    %106 = vst.msk [vmem:[%s105] ss:$8 sm:$0xf] %vm104, %v103
    %s107 = scalar_lea.vmem [#allocation0], 64
    %108 = vst.msk [vmem:[%s107] ss:$8 sm:$0xf0] %vm104, %v103
    %s109 = scalar_lea.vmem %s0, 66
    %v110 = vld [vmem:[%s109] ss:$4 sm:$0xff]
    %111 = vrot.lane.b32.xlu0 %v110, 64
    %v112 = vpop.permute.xlu0 %111
    %vm113 = vcmask 785920
    %s114 = scalar_lea.vmem [#allocation0], 128
    %115 = vst.msk [vmem:[%s114] ss:$8 sm:$0xf] %vm113, %v112
    %s116 = scalar_lea.vmem [#allocation0], 128
    %117 = vst.msk [vmem:[%s116] ss:$8 sm:$0xf0] %vm113, %v112
    %s118 = scalar_lea.vmem %s0, 98
    %v119 = vld [vmem:[%s118] ss:$4 sm:$0xff]
    %120 = vrot.lane.b32.xlu0 %v119, 64
    %v121 = vpop.permute.xlu0 %120
    %vm122 = vcmask 785920
    %s123 = scalar_lea.vmem [#allocation0], 192
    %124 = vst.msk [vmem:[%s123] ss:$8 sm:$0xf] %vm122, %v121
    %s125 = scalar_lea.vmem [#allocation0], 192
    %126 = vst.msk [vmem:[%s125] ss:$8 sm:$0xf0] %vm122, %v121
    %s127 = scalar_lea.vmem %s0, 130
    %v128 = vld [vmem:[%s127] ss:$4 sm:$0xff]
    %129 = vrot.lane.b32.xlu0 %v128, 64
    %v130 = vpop.permute.xlu0 %129
    %vm131 = vcmask 785920
    %s132 = scalar_lea.vmem [#allocation0], 256
    %133 = vst.msk [vmem:[%s132] ss:$8 sm:$0xf] %vm131, %v130
    %s134 = scalar_lea.vmem [#allocation0], 256
    %135 = vst.msk [vmem:[%s134] ss:$8 sm:$0xf0] %vm131, %v130
    %s136 = scalar_lea.vmem %s0, 162
    %v137 = vld [vmem:[%s136] ss:$4 sm:$0xff]
    %138 = vrot.lane.b32.xlu0 %v137, 64
    %v139 = vpop.permute.xlu0 %138
    %vm140 = vcmask 785920
    %s141 = scalar_lea.vmem [#allocation0], 320
    %142 = vst.msk [vmem:[%s141] ss:$8 sm:$0xf] %vm140, %v139
    %s143 = scalar_lea.vmem [#allocation0], 320
    %144 = vst.msk [vmem:[%s143] ss:$8 sm:$0xf0] %vm140, %v139
    %s145 = scalar_lea.vmem %s0, 1
    %v146 = vld [vmem:[%s145] ss:$4 sm:$0xff]
    %147 = vrot.lane.b32.xlu0 %v146, 32
    %v148 = vpop.permute.xlu0 %147
    %vm149 = vcmask 523520
    %150 = vst.msk [vmem:[#allocation0] ss:$8 sm:$0xf] %vm149, %v148
    %151 = vst.msk [vmem:[#allocation0] ss:$8 sm:$0xf0] %vm149, %v148
    %s152 = scalar_lea.vmem %s0, 33
    %v153 = vld [vmem:[%s152] ss:$4 sm:$0xff]
    %154 = vrot.lane.b32.xlu0 %v153, 32
    %v155 = vpop.permute.xlu0 %154
    %vm156 = vcmask 523520
    %s157 = scalar_lea.vmem [#allocation0], 64
    %158 = vst.msk [vmem:[%s157] ss:$8 sm:$0xf] %vm156, %v155
    %s159 = scalar_lea.vmem [#allocation0], 64
    %160 = vst.msk [vmem:[%s159] ss:$8 sm:$0xf0] %vm156, %v155
    %s161 = scalar_lea.vmem %s0, 65
    %v162 = vld [vmem:[%s161] ss:$4 sm:$0xff]
    %163 = vrot.lane.b32.xlu0 %v162, 32
    %v164 = vpop.permute.xlu0 %163
    %vm165 = vcmask 523520
    %s166 = scalar_lea.vmem [#allocation0], 128
    %167 = vst.msk [vmem:[%s166] ss:$8 sm:$0xf] %vm165, %v164
    %s168 = scalar_lea.vmem [#allocation0], 128
    %169 = vst.msk [vmem:[%s168] ss:$8 sm:$0xf0] %vm165, %v164
    %s170 = scalar_lea.vmem %s0, 97
    %v171 = vld [vmem:[%s170] ss:$4 sm:$0xff]
    %172 = vrot.lane.b32.xlu0 %v171, 32
    %v173 = vpop.permute.xlu0 %172
    %vm174 = vcmask 523520
    %s175 = scalar_lea.vmem [#allocation0], 192
    %176 = vst.msk [vmem:[%s175] ss:$8 sm:$0xf] %vm174, %v173
    %s177 = scalar_lea.vmem [#allocation0], 192
    %178 = vst.msk [vmem:[%s177] ss:$8 sm:$0xf0] %vm174, %v173
    %s179 = scalar_lea.vmem %s0, 129
    %v180 = vld [vmem:[%s179] ss:$4 sm:$0xff]
    %181 = vrot.lane.b32.xlu0 %v180, 32
    %v182 = vpop.permute.xlu0 %181
    %vm183 = vcmask 523520
    %s184 = scalar_lea.vmem [#allocation0], 256
    %185 = vst.msk [vmem:[%s184] ss:$8 sm:$0xf] %vm183, %v182
    %s186 = scalar_lea.vmem [#allocation0], 256
    %187 = vst.msk [vmem:[%s186] ss:$8 sm:$0xf0] %vm183, %v182
    %s188 = scalar_lea.vmem %s0, 161
    %v189 = vld [vmem:[%s188] ss:$4 sm:$0xff]
    %190 = vrot.lane.b32.xlu0 %v189, 32
    %v191 = vpop.permute.xlu0 %190
    %vm192 = vcmask 523520
    %s193 = scalar_lea.vmem [#allocation0], 320
    %194 = vst.msk [vmem:[%s193] ss:$8 sm:$0xf] %vm192, %v191
    %s195 = scalar_lea.vmem [#allocation0], 320
    %196 = vst.msk [vmem:[%s195] ss:$8 sm:$0xf0] %vm192, %v191
    %s198 = sshllo.u32 0, 1
    %v200 = vld [vmem:[#allocation0] sm:%s198]
    %s201 = sshllo.u32 0, 1
    %202 = vst [vmem:[%s1] sm:%s201] %v200
    %s203 = scalar_lea.vmem [#allocation0], 8
    %v204 = vld [vmem:[%s203] sm:%s198]
    %s205 = sshllo.u32 0, 1
    %s206 = scalar_lea.vmem %s1, 1
    %207 = vst [vmem:[%s206] sm:%s205] %v204
    %s208 = scalar_lea.vmem [#allocation0], 16
    %v209 = vld [vmem:[%s208] sm:%s198]
    %s210 = sshllo.u32 0, 1
    %s211 = smul.addr 1, 2
    %s212 = scalar_lea.vmem %s1, %s211
    %213 = vst [vmem:[%s212] sm:%s210] %v209
    %s214 = scalar_lea.vmem [#allocation0], 24
    %v215 = vld [vmem:[%s214] sm:%s198]
    %s216 = sshllo.u32 0, 1
    %s217 = smul.addr 1, 3
    %s218 = scalar_lea.vmem %s1, %s217
    %219 = vst [vmem:[%s218] sm:%s216] %v215
    %s220 = scalar_lea.vmem [#allocation0], 32
    %v221 = vld [vmem:[%s220] sm:%s198]
    %s222 = sshllo.u32 0, 1
    %s223 = smul.addr 1, 4
    %s224 = scalar_lea.vmem %s1, %s223
    %225 = vst [vmem:[%s224] sm:%s222] %v221
    %s226 = scalar_lea.vmem [#allocation0], 40
    %v227 = vld [vmem:[%s226] sm:%s198]
    %s228 = sshllo.u32 0, 1
    %s229 = smul.addr 1, 5
    %s230 = scalar_lea.vmem %s1, %s229
    %231 = vst [vmem:[%s230] sm:%s228] %v227
    %s232 = scalar_lea.vmem [#allocation0], 48
    %v233 = vld [vmem:[%s232] sm:%s198]
    %s234 = sshllo.u32 0, 1
    %s235 = smul.addr 1, 6
    %s236 = scalar_lea.vmem %s1, %s235
    %237 = vst [vmem:[%s236] sm:%s234] %v233
    %s238 = scalar_lea.vmem [#allocation0], 56
    %v239 = vld [vmem:[%s238] sm:%s198]
    %s240 = sshllo.u32 0, 1
    %s241 = smul.addr 1, 7
    %s242 = scalar_lea.vmem %s1, %s241
    %243 = vst [vmem:[%s242] sm:%s240] %v239
    %s244 = scalar_lea.vmem [#allocation0], 64
    %v245 = vld [vmem:[%s244] sm:%s198]
    %s246 = sshllo.u32 0, 1
    %s247 = smul.addr 1, 8
    %s248 = scalar_lea.vmem %s1, %s247
    %249 = vst [vmem:[%s248] sm:%s246] %v245
    %s250 = scalar_lea.vmem [#allocation0], 72
    %v251 = vld [vmem:[%s250] sm:%s198]
    %s252 = sshllo.u32 0, 1
    %s253 = smul.addr 1, 9
    %s254 = scalar_lea.vmem %s1, %s253
    %255 = vst [vmem:[%s254] sm:%s252] %v251
    %s256 = scalar_lea.vmem [#allocation0], 80
    %v257 = vld [vmem:[%s256] sm:%s198]
    %s258 = sshllo.u32 0, 1
    %s259 = smul.addr 1, 10
    %s260 = scalar_lea.vmem %s1, %s259
    %261 = vst [vmem:[%s260] sm:%s258] %v257
    %s262 = scalar_lea.vmem [#allocation0], 88
    %v263 = vld [vmem:[%s262] sm:%s198]
    %s264 = sshllo.u32 0, 1
    %s265 = smul.addr 1, 11
    %s266 = scalar_lea.vmem %s1, %s265
    %267 = vst [vmem:[%s266] sm:%s264] %v263
    %s268 = scalar_lea.vmem [#allocation0], 96
    %v269 = vld [vmem:[%s268] sm:%s198]
    %s270 = sshllo.u32 0, 1
    %s271 = smul.addr 1, 12
    %s272 = scalar_lea.vmem %s1, %s271
    %273 = vst [vmem:[%s272] sm:%s270] %v269
    %s274 = scalar_lea.vmem [#allocation0], 104
    %v275 = vld [vmem:[%s274] sm:%s198]
    %s276 = sshllo.u32 0, 1
    %s277 = smul.addr 1, 13
    %s278 = scalar_lea.vmem %s1, %s277
    %279 = vst [vmem:[%s278] sm:%s276] %v275
    %s280 = scalar_lea.vmem [#allocation0], 112
    %v281 = vld [vmem:[%s280] sm:%s198]
    %s282 = sshllo.u32 0, 1
    %s283 = smul.addr 1, 14
    %s284 = scalar_lea.vmem %s1, %s283
    %285 = vst [vmem:[%s284] sm:%s282] %v281
    %s286 = scalar_lea.vmem [#allocation0], 120
    %v287 = vld [vmem:[%s286] sm:%s198]
    %s288 = sshllo.u32 0, 1
    %s289 = smul.addr 1, 15
    %s290 = scalar_lea.vmem %s1, %s289
    %291 = vst [vmem:[%s290] sm:%s288] %v287
    %s292 = scalar_lea.vmem [#allocation0], 128
    %v293 = vld [vmem:[%s292] sm:%s198]
    %s294 = sshllo.u32 0, 1
    %s295 = smul.addr 1, 16
    %s296 = scalar_lea.vmem %s1, %s295
    %297 = vst [vmem:[%s296] sm:%s294] %v293
    %s298 = scalar_lea.vmem [#allocation0], 136
    %v299 = vld [vmem:[%s298] sm:%s198]
    %s300 = sshllo.u32 0, 1
    %s301 = smul.addr 1, 17
    %s302 = scalar_lea.vmem %s1, %s301
    %303 = vst [vmem:[%s302] sm:%s300] %v299
    %s304 = scalar_lea.vmem [#allocation0], 144
    %v305 = vld [vmem:[%s304] sm:%s198]
    %s306 = sshllo.u32 0, 1
    %s307 = smul.addr 1, 18
    %s308 = scalar_lea.vmem %s1, %s307
    %309 = vst [vmem:[%s308] sm:%s306] %v305
    %s310 = scalar_lea.vmem [#allocation0], 152
    %v311 = vld [vmem:[%s310] sm:%s198]
    %s312 = sshllo.u32 0, 1
    %s313 = smul.addr 1, 19
    %s314 = scalar_lea.vmem %s1, %s313
    %315 = vst [vmem:[%s314] sm:%s312] %v311
    %s316 = scalar_lea.vmem [#allocation0], 160
    %v317 = vld [vmem:[%s316] sm:%s198]
    %s318 = sshllo.u32 0, 1
    %s319 = smul.addr 1, 20
    %s320 = scalar_lea.vmem %s1, %s319
    %321 = vst [vmem:[%s320] sm:%s318] %v317
    %s322 = scalar_lea.vmem [#allocation0], 168
    %v323 = vld [vmem:[%s322] sm:%s198]
    %s324 = sshllo.u32 0, 1
    %s325 = smul.addr 1, 21
    %s326 = scalar_lea.vmem %s1, %s325
    %327 = vst [vmem:[%s326] sm:%s324] %v323
    %s328 = scalar_lea.vmem [#allocation0], 176
    %v329 = vld [vmem:[%s328] sm:%s198]
    %s330 = sshllo.u32 0, 1
    %s331 = smul.addr 1, 22
    %s332 = scalar_lea.vmem %s1, %s331
    %333 = vst [vmem:[%s332] sm:%s330] %v329
    %s334 = scalar_lea.vmem [#allocation0], 184
    %v335 = vld [vmem:[%s334] sm:%s198]
    %s336 = sshllo.u32 0, 1
    %s337 = smul.addr 1, 23
    %s338 = scalar_lea.vmem %s1, %s337
    %339 = vst [vmem:[%s338] sm:%s336] %v335
    %s340 = scalar_lea.vmem [#allocation0], 192
    %v341 = vld [vmem:[%s340] sm:%s198]
    %s342 = sshllo.u32 0, 1
    %s343 = smul.addr 1, 24
    %s344 = scalar_lea.vmem %s1, %s343
    %345 = vst [vmem:[%s344] sm:%s342] %v341
    %s346 = scalar_lea.vmem [#allocation0], 200
    %v347 = vld [vmem:[%s346] sm:%s198]
    %s348 = sshllo.u32 0, 1
    %s349 = smul.addr 1, 25
    %s350 = scalar_lea.vmem %s1, %s349
    %351 = vst [vmem:[%s350] sm:%s348] %v347
    %s352 = scalar_lea.vmem [#allocation0], 208
    %v353 = vld [vmem:[%s352] sm:%s198]
    %s354 = sshllo.u32 0, 1
    %s355 = smul.addr 1, 26
    %s356 = scalar_lea.vmem %s1, %s355
    %357 = vst [vmem:[%s356] sm:%s354] %v353
    %s358 = scalar_lea.vmem [#allocation0], 216
    %v359 = vld [vmem:[%s358] sm:%s198]
    %s360 = sshllo.u32 0, 1
    %s361 = smul.addr 1, 27
    %s362 = scalar_lea.vmem %s1, %s361
    %363 = vst [vmem:[%s362] sm:%s360] %v359
    %s364 = scalar_lea.vmem [#allocation0], 224
    %v365 = vld [vmem:[%s364] sm:%s198]
    %s366 = sshllo.u32 0, 1
    %s367 = smul.addr 1, 28
    %s368 = scalar_lea.vmem %s1, %s367
    %369 = vst [vmem:[%s368] sm:%s366] %v365
    %s370 = scalar_lea.vmem [#allocation0], 232
    %v371 = vld [vmem:[%s370] sm:%s198]
    %s372 = sshllo.u32 0, 1
    %s373 = smul.addr 1, 29
    %s374 = scalar_lea.vmem %s1, %s373
    %375 = vst [vmem:[%s374] sm:%s372] %v371
    %s376 = scalar_lea.vmem [#allocation0], 240
    %v377 = vld [vmem:[%s376] sm:%s198]
    %s378 = sshllo.u32 0, 1
    %s379 = smul.addr 1, 30
    %s380 = scalar_lea.vmem %s1, %s379
    %381 = vst [vmem:[%s380] sm:%s378] %v377
    %s382 = scalar_lea.vmem [#allocation0], 248
    %v383 = vld [vmem:[%s382] sm:%s198]
    %s384 = sshllo.u32 0, 1
    %s385 = smul.addr 1, 31
    %s386 = scalar_lea.vmem %s1, %s385
    %387 = vst [vmem:[%s386] sm:%s384] %v383
    %s388 = scalar_lea.vmem [#allocation0], 256
    %v389 = vld [vmem:[%s388] sm:%s198]
    %s390 = sshllo.u32 0, 1
    %s391 = smul.addr 1, 32
    %s392 = scalar_lea.vmem %s1, %s391
    %393 = vst [vmem:[%s392] sm:%s390] %v389
    %s394 = scalar_lea.vmem [#allocation0], 264
    %v395 = vld [vmem:[%s394] sm:%s198]
    %s396 = sshllo.u32 0, 1
    %s397 = smul.addr 1, 33
    %s398 = scalar_lea.vmem %s1, %s397
    %399 = vst [vmem:[%s398] sm:%s396] %v395
    %s400 = scalar_lea.vmem [#allocation0], 272
    %v401 = vld [vmem:[%s400] sm:%s198]
    %s402 = sshllo.u32 0, 1
    %s403 = smul.addr 1, 34
    %s404 = scalar_lea.vmem %s1, %s403
    %405 = vst [vmem:[%s404] sm:%s402] %v401
    %s406 = scalar_lea.vmem [#allocation0], 280
    %v407 = vld [vmem:[%s406] sm:%s198]
    %s408 = sshllo.u32 0, 1
    %s409 = smul.addr 1, 35
    %s410 = scalar_lea.vmem %s1, %s409
    %411 = vst [vmem:[%s410] sm:%s408] %v407
    %s412 = scalar_lea.vmem [#allocation0], 288
    %v413 = vld [vmem:[%s412] sm:%s198]
    %s414 = sshllo.u32 0, 1
    %s415 = smul.addr 1, 36
    %s416 = scalar_lea.vmem %s1, %s415
    %417 = vst [vmem:[%s416] sm:%s414] %v413
    %s418 = scalar_lea.vmem [#allocation0], 296
    %v419 = vld [vmem:[%s418] sm:%s198]
    %s420 = sshllo.u32 0, 1
    %s421 = smul.addr 1, 37
    %s422 = scalar_lea.vmem %s1, %s421
    %423 = vst [vmem:[%s422] sm:%s420] %v419
    %s424 = scalar_lea.vmem [#allocation0], 304
    %v425 = vld [vmem:[%s424] sm:%s198]
    %s426 = sshllo.u32 0, 1
    %s427 = smul.addr 1, 38
    %s428 = scalar_lea.vmem %s1, %s427
    %429 = vst [vmem:[%s428] sm:%s426] %v425
    %s430 = scalar_lea.vmem [#allocation0], 312
    %v431 = vld [vmem:[%s430] sm:%s198]
    %s432 = sshllo.u32 0, 1
    %s433 = smul.addr 1, 39
    %s434 = scalar_lea.vmem %s1, %s433
    %435 = vst [vmem:[%s434] sm:%s432] %v431
    %s436 = scalar_lea.vmem [#allocation0], 320
    %v437 = vld [vmem:[%s436] sm:%s198]
    %s438 = sshllo.u32 0, 1
    %s439 = smul.addr 1, 40
    %s440 = scalar_lea.vmem %s1, %s439
    %441 = vst [vmem:[%s440] sm:%s438] %v437
    %s442 = scalar_lea.vmem [#allocation0], 328
    %v443 = vld [vmem:[%s442] sm:%s198]
    %s444 = sshllo.u32 0, 1
    %s445 = smul.addr 1, 41
    %s446 = scalar_lea.vmem %s1, %s445
    %447 = vst [vmem:[%s446] sm:%s444] %v443
    %s448 = scalar_lea.vmem [#allocation0], 336
    %v449 = vld [vmem:[%s448] sm:%s198]
    %s450 = sshllo.u32 0, 1
    %s451 = smul.addr 1, 42
    %s452 = scalar_lea.vmem %s1, %s451
    %453 = vst [vmem:[%s452] sm:%s450] %v449
    %s454 = scalar_lea.vmem [#allocation0], 344
    %v455 = vld [vmem:[%s454] sm:%s198]
    %s456 = sshllo.u32 0, 1
    %s457 = smul.addr 1, 43
    %s458 = scalar_lea.vmem %s1, %s457
    %459 = vst [vmem:[%s458] sm:%s456] %v455
    %s460 = scalar_lea.vmem [#allocation0], 352
    %v461 = vld [vmem:[%s460] sm:%s198]
    %s462 = sshllo.u32 0, 1
    %s463 = smul.addr 1, 44
    %s464 = scalar_lea.vmem %s1, %s463
    %465 = vst [vmem:[%s464] sm:%s462] %v461
    %s466 = scalar_lea.vmem [#allocation0], 360
    %v467 = vld [vmem:[%s466] sm:%s198]
    %s468 = sshllo.u32 0, 1
    %s469 = smul.addr 1, 45
    %s470 = scalar_lea.vmem %s1, %s469
    %471 = vst [vmem:[%s470] sm:%s468] %v467
    %s472 = scalar_lea.vmem [#allocation0], 368
    %v473 = vld [vmem:[%s472] sm:%s198]
    %s474 = sshllo.u32 0, 1
    %s475 = smul.addr 1, 46
    %s476 = scalar_lea.vmem %s1, %s475
    %477 = vst [vmem:[%s476] sm:%s474] %v473
    %s478 = scalar_lea.vmem [#allocation0], 376
    %v479 = vld [vmem:[%s478] sm:%s198]
    %s480 = sshllo.u32 0, 1
    %s481 = smul.addr 1, 47
    %s482 = scalar_lea.vmem %s1, %s481
    %483 = vst [vmem:[%s482] sm:%s480] %v479

// kernel: _lambda_.1
$region0: #{_lambda_.1}
  #allocation0 [shape = 'u32[]', space=smem, size = 0x4, offset = 0x4, fixed_abs, tag = 'smem constant byte address 0x4 - core index']
  #allocation1 [shape = 'u32[144,128]{1,0:T(1,128)}', space=vmem, size = 0x12000, scoped, tag = 'internal scratch']
  %s0 = inlined_call_operand.vmem [shape: f32[12,64,128], index: 0, kind: input, shape index: {}]
  %s1 = inlined_call_operand.vmem [shape: bf16[4,64,128], index: 1, kind: input, shape index: {}]
  %s2 = inlined_call_operand.vmem [shape: f32[64,128], index: 2, kind: output, shape index: {}]
  %s3 = sld [smem:[#allocation0]]
  $region127: #{_lambda_.1} parent=0
    _
  %s5 = ssub.s32 1, %s3
  %s6 = scalar_select 0, %s5, %s3
  $region1: #{_lambda_.1} parent=0
    #allocation2 [shape = 'u8[393216]{0}', space=vmem, size = 0x60000, scoped, tag = 'input window, operand 0']
    #allocation3 [shape = 'u8[65536]{0}', space=vmem, size = 0x10000, scoped, tag = 'input window, operand 1']
    loop: start=0, step=1, limit=4
    $region2: #{_lambda_.1} parent=1 // loop_pre_header
      _
    $region3: #{_lambda_.1} parent=1 // loop_header
      %s8 = sphi 0, %s12
      %p9 = scmp.ge.s32.totalorder %s8, 4
      %s18 = sphi 0, %s20
      %s21 = sphi 0, %s18
      %s22 = sphi 0, %s21
      %s38 = sphi 0, %s22
      %s44 = sphi 0, %s46
      %s47 = sphi 0, %s44
      %s48 = sphi 0, %s47
      %s64 = sphi 0, %s48
      %s70 = sphi 0, %s72
      %s73 = sphi 0, %s70
      %s74 = sphi 0, %s73
      %s90 = sphi 0, %s74
    $region4: #{_lambda_.1} parent=1 // loop_header_branch
      %11 = sbr.rel (%p9) target = $region8
    $region5: #{_lambda_.1} parent=1 // loop_body
      %s13 = ssub.s32 %s8, 1
      %s14 = ssub.s32 %s8, 2
      %s15 = sadd.s32 %s8, 1
      %s16 = ssub.s32 %s8, %s15
      %p17 = scmp.eq.s32.totalorder %s16, 0
      %s19 = sadd.s32 %s18, 1
      %s20 = scalar_select %p17, %s18, %s19
      %p23 = pneg %p17
      %p24 = scmp.eq.s32.totalorder %s8, 1
      %p25 = por %p23, %p24
      %p26 = scmp.ne.s32.totalorder %s18, %s21
      %p27 = scmp.eq.s32.totalorder %s8, 0
      %p28 = por %p26, %p27
      %p29 = scmp.ne.s32.totalorder %s18, %s21
      %p30 = scmp.eq.s32.totalorder %s13, 1
      %p31 = por %p29, %p30
      %p32 = scmp.ne.s32.totalorder %s21, %s22
      %p33 = scmp.eq.s32.totalorder %s13, 0
      %p34 = por %p32, %p33
      %p35 = scmp.ne.s32.totalorder %s21, %s22
      %p36 = scmp.eq.s32.totalorder %s14, 1
      %p37 = por %p35, %p36
      %p39 = scmp.ne.s32.totalorder %s22, %s38
      %p40 = scmp.eq.s32.totalorder %s14, 0
      %p41 = por %p39, %p40
      %s42 = ssub.s32 %s8, %s15
      %p43 = scmp.eq.s32.totalorder %s42, 0
      %s45 = sadd.s32 %s44, 1
      %s46 = scalar_select %p43, %s44, %s45
      %p49 = pneg %p43
      %p50 = scmp.eq.s32.totalorder %s8, 1
      %p51 = por %p49, %p50
      %p52 = scmp.ne.s32.totalorder %s44, %s47
      %p53 = scmp.eq.s32.totalorder %s8, 0
      %p54 = por %p52, %p53
      %p55 = scmp.ne.s32.totalorder %s44, %s47
      %p56 = scmp.eq.s32.totalorder %s13, 1
      %p57 = por %p55, %p56
      %p58 = scmp.ne.s32.totalorder %s47, %s48
      %p59 = scmp.eq.s32.totalorder %s13, 0
      %p60 = por %p58, %p59
      %p61 = scmp.ne.s32.totalorder %s47, %s48
      %p62 = scmp.eq.s32.totalorder %s14, 1
      %p63 = por %p61, %p62
      %p65 = scmp.ne.s32.totalorder %s48, %s64
      %p66 = scmp.eq.s32.totalorder %s14, 0
      %p67 = por %p65, %p66
      %s68 = ssub.s32 %s8, %s15
      %p69 = scmp.eq.s32.totalorder %s68, 0
      %s71 = sadd.s32 %s70, 1
      %s72 = scalar_select %p69, %s70, %s71
      %p75 = pneg %p69
      %p76 = scmp.eq.s32.totalorder %s8, 1
      %p77 = por %p75, %p76
      %p78 = scmp.ne.s32.totalorder %s70, %s73
      %p79 = scmp.eq.s32.totalorder %s8, 0
      %p80 = por %p78, %p79
      %p81 = scmp.ne.s32.totalorder %s70, %s73
      %p82 = scmp.eq.s32.totalorder %s13, 1
      %p83 = por %p81, %p82
      %p84 = scmp.ne.s32.totalorder %s73, %s74
      %p85 = scmp.eq.s32.totalorder %s13, 0
      %p86 = por %p84, %p85
      %p87 = scmp.ne.s32.totalorder %s73, %s74
      %p88 = scmp.eq.s32.totalorder %s14, 1
      %p89 = por %p87, %p88
      %p91 = scmp.ne.s32.totalorder %s74, %s90
      %p92 = scmp.eq.s32.totalorder %s14, 0
      %p93 = por %p91, %p92
      %p94 = scmp.le.s32.totalorder 1, %s8
      %p95 = scmp.lt.s32.totalorder %s8, 3
      %p96 = pnand %p94, %p95
      %p97 = pneg %p96
      // Predicated region
      $region9: #{_lambda_.1} parent=5 // pred_check
        _
      $region10: #{_lambda_.1} parent=5 // pred_check_branch
        %99 = sbr.rel (%p96) target = $region12
      $region11: #{_lambda_.1} parent=5 // pred_region
        %s100 = ssub.s32 %s8, 1
      $region12: #{_lambda_.1} parent=5 // pred_fallthru
        _
      %p101 = scmp.lt.s32.totalorder %s8, 2
      // Predicated region
      $region13: #{_lambda_.1} parent=5 // pred_check
        %p102 = pneg %p101
      $region14: #{_lambda_.1} parent=5 // pred_check_branch
        %104 = sbr.rel (%p102) target = $region16
      $region15: #{_lambda_.1} parent=5 // pred_region
        // Predicated region
        $region17: #{_lambda_.1} parent=15 // pred_check
          %p105 = pneg %p28
        $region18: #{_lambda_.1} parent=15 // pred_check_branch
          %107 = sbr.rel (%p105) target = $region20
        $region19: #{_lambda_.1} parent=15 // pred_region
          %s108 = sand.u32 %s18, 1
          %s109 = sand.u32 %s18, 1
          %s110 = smul.addr %s109, 384
          %s111 = scalar_lea.vmem [#allocation2], %s110
          %s112 = smul.u32 4, %s8
          %s113 = smul.addr %s112, 8
          %s114 = scalar_lea.vmem %s0, %s113
          // Predicated region
          $region21: #{_lambda_.1} parent=19 // pred_check
            _
          $region22: #{_lambda_.1} parent=19 // pred_check_branch
            %116 = sbr.rel (0) target = $region24
          $region23: #{_lambda_.1} parent=19 // pred_region
            // Predicated region
            $region25: #{_lambda_.1} parent=23 // pred_check
              _
            $region26: #{_lambda_.1} parent=23 // pred_check_branch
              %118 = sbr.rel (0) target = $region28
            $region27: #{_lambda_.1} parent=23 // pred_region
              // Predicated region
              $region40: #{_lambda_.1} parent=27 // pred_check
                _
              $region41: #{_lambda_.1} parent=27 // pred_check_branch
                %227 = sbr.rel (0) target = $region43
              $region42: #{_lambda_.1} parent=27 // pred_region
                loop: start=0, step=1, limit=1
                $region44: #{_lambda_.1} parent=42 // loop_pre_header
                  _
                $region45: #{_lambda_.1} parent=42 // loop_header
                  %s229 = sphi 0, %s233
                  %p230 = scmp.ge.s32.totalorder %s229, 1
                  %s234 = sphi %s114, %s114
                  %s235 = sphi %s111, %s111
                $region46: #{_lambda_.1} parent=42 // loop_header_branch
                  %232 = sbr.rel (%p230) target = $region50
                $region47: #{_lambda_.1} parent=42 // loop_body
                  %v236 = vld [vmem:[%s234] sm:$0xff]
                  %237 = vst [vmem:[%s235] sm:$0xff] %v236
                  %v238 = vld [vmem:[%s234 + $0x8] sm:$0xff]
                  %239 = vst [vmem:[%s235 + $0x8] sm:$0xff] %v238
                  %v240 = vld [vmem:[%s234 + $0x10] sm:$0xff]
                  %241 = vst [vmem:[%s235 + $0x10] sm:$0xff] %v240
                  %v242 = vld [vmem:[%s234 + $0x18] sm:$0xff]
                  %243 = vst [vmem:[%s235 + $0x18] sm:$0xff] %v242
                  %v244 = vld [vmem:[%s234 + $0x40] sm:$0xff]
                  %245 = vst [vmem:[%s235 + $0x20] sm:$0xff] %v244
                  %v246 = vld [vmem:[%s234 + $0x48] sm:$0xff]
                  %247 = vst [vmem:[%s235 + $0x28] sm:$0xff] %v246
                  %v248 = vld [vmem:[%s234 + $0x50] sm:$0xff]
                  %249 = vst [vmem:[%s235 + $0x30] sm:$0xff] %v248
                  %v250 = vld [vmem:[%s234 + $0x58] sm:$0xff]
                  %251 = vst [vmem:[%s235 + $0x38] sm:$0xff] %v250
                  %v252 = vld [vmem:[%s234 + $0x80] sm:$0xff]
                  %253 = vst [vmem:[%s235 + $0x40] sm:$0xff] %v252
                  %v254 = vld [vmem:[%s234 + $0x88] sm:$0xff]
                  %255 = vst [vmem:[%s235 + $0x48] sm:$0xff] %v254
                  %v256 = vld [vmem:[%s234 + $0x90] sm:$0xff]
                  %257 = vst [vmem:[%s235 + $0x50] sm:$0xff] %v256
                  %v258 = vld [vmem:[%s234 + $0x98] sm:$0xff]
                  %259 = vst [vmem:[%s235 + $0x58] sm:$0xff] %v258
                  %v260 = vld [vmem:[%s234 + $0xc0] sm:$0xff]
                  %261 = vst [vmem:[%s235 + $0x60] sm:$0xff] %v260
                  %v262 = vld [vmem:[%s234 + $0xc8] sm:$0xff]
                  %263 = vst [vmem:[%s235 + $0x68] sm:$0xff] %v262
                  %v264 = vld [vmem:[%s234 + $0xd0] sm:$0xff]
                  %265 = vst [vmem:[%s235 + $0x70] sm:$0xff] %v264
                  %v266 = vld [vmem:[%s234 + $0xd8] sm:$0xff]
                  %267 = vst [vmem:[%s235 + $0x78] sm:$0xff] %v266
                  %v268 = vld [vmem:[%s234 + $0x100] sm:$0xff]
                  %269 = vst [vmem:[%s235 + $0x80] sm:$0xff] %v268
                  %v270 = vld [vmem:[%s234 + $0x108] sm:$0xff]
                  %271 = vst [vmem:[%s235 + $0x88] sm:$0xff] %v270
                  %v272 = vld [vmem:[%s234 + $0x110] sm:$0xff]
                  %273 = vst [vmem:[%s235 + $0x90] sm:$0xff] %v272
                  %v274 = vld [vmem:[%s234 + $0x118] sm:$0xff]
                  %275 = vst [vmem:[%s235 + $0x98] sm:$0xff] %v274
                  %v276 = vld [vmem:[%s234 + $0x140] sm:$0xff]
                  %277 = vst [vmem:[%s235 + $0xa0] sm:$0xff] %v276
                  %v278 = vld [vmem:[%s234 + $0x148] sm:$0xff]
                  %279 = vst [vmem:[%s235 + $0xa8] sm:$0xff] %v278
                  %v280 = vld [vmem:[%s234 + $0x150] sm:$0xff]
                  %281 = vst [vmem:[%s235 + $0xb0] sm:$0xff] %v280
                  %v282 = vld [vmem:[%s234 + $0x158] sm:$0xff]
                  %283 = vst [vmem:[%s235 + $0xb8] sm:$0xff] %v282
                  %v284 = vld [vmem:[%s234 + $0x180] sm:$0xff]
                  %285 = vst [vmem:[%s235 + $0xc0] sm:$0xff] %v284
                  %v286 = vld [vmem:[%s234 + $0x188] sm:$0xff]
                  %287 = vst [vmem:[%s235 + $0xc8] sm:$0xff] %v286
                  %v288 = vld [vmem:[%s234 + $0x190] sm:$0xff]
                  %289 = vst [vmem:[%s235 + $0xd0] sm:$0xff] %v288
                  %v290 = vld [vmem:[%s234 + $0x198] sm:$0xff]
                  %291 = vst [vmem:[%s235 + $0xd8] sm:$0xff] %v290
                  %v292 = vld [vmem:[%s234 + $0x1c0] sm:$0xff]
                  %293 = vst [vmem:[%s235 + $0xe0] sm:$0xff] %v292
                  %v294 = vld [vmem:[%s234 + $0x1c8] sm:$0xff]
                  %295 = vst [vmem:[%s235 + $0xe8] sm:$0xff] %v294
                  %v296 = vld [vmem:[%s234 + $0x1d0] sm:$0xff]
                  %297 = vst [vmem:[%s235 + $0xf0] sm:$0xff] %v296
                  %v298 = vld [vmem:[%s234 + $0x1d8] sm:$0xff]
                  %299 = vst [vmem:[%s235 + $0xf8] sm:$0xff] %v298
                  %v300 = vld [vmem:[%s234 + $0x200] sm:$0xff]
                  %301 = vst [vmem:[%s235 + $0x100] sm:$0xff] %v300
                  %v302 = vld [vmem:[%s234 + $0x208] sm:$0xff]
                  %303 = vst [vmem:[%s235 + $0x108] sm:$0xff] %v302
                  %v304 = vld [vmem:[%s234 + $0x210] sm:$0xff]
                  %305 = vst [vmem:[%s235 + $0x110] sm:$0xff] %v304
                  %v306 = vld [vmem:[%s234 + $0x218] sm:$0xff]
                  %307 = vst [vmem:[%s235 + $0x118] sm:$0xff] %v306
                  %v308 = vld [vmem:[%s234 + $0x240] sm:$0xff]
                  %309 = vst [vmem:[%s235 + $0x120] sm:$0xff] %v308
                  %v310 = vld [vmem:[%s234 + $0x248] sm:$0xff]
                  %311 = vst [vmem:[%s235 + $0x128] sm:$0xff] %v310
                  %v312 = vld [vmem:[%s234 + $0x250] sm:$0xff]
                  %313 = vst [vmem:[%s235 + $0x130] sm:$0xff] %v312
                  %v314 = vld [vmem:[%s234 + $0x258] sm:$0xff]
                  %315 = vst [vmem:[%s235 + $0x138] sm:$0xff] %v314
                  %v316 = vld [vmem:[%s234 + $0x280] sm:$0xff]
                  %317 = vst [vmem:[%s235 + $0x140] sm:$0xff] %v316
                  %v318 = vld [vmem:[%s234 + $0x288] sm:$0xff]
                  %319 = vst [vmem:[%s235 + $0x148] sm:$0xff] %v318
                  %v320 = vld [vmem:[%s234 + $0x290] sm:$0xff]
                  %321 = vst [vmem:[%s235 + $0x150] sm:$0xff] %v320
                  %v322 = vld [vmem:[%s234 + $0x298] sm:$0xff]
                  %323 = vst [vmem:[%s235 + $0x158] sm:$0xff] %v322
                  %v324 = vld [vmem:[%s234 + $0x2c0] sm:$0xff]
                  %325 = vst [vmem:[%s235 + $0x160] sm:$0xff] %v324
                  %v326 = vld [vmem:[%s234 + $0x2c8] sm:$0xff]
                  %327 = vst [vmem:[%s235 + $0x168] sm:$0xff] %v326
                  %v328 = vld [vmem:[%s234 + $0x2d0] sm:$0xff]
                  %329 = vst [vmem:[%s235 + $0x170] sm:$0xff] %v328
                  %v330 = vld [vmem:[%s234 + $0x2d8] sm:$0xff]
                  %331 = vst [vmem:[%s235 + $0x178] sm:$0xff] %v330
                $region48: #{_lambda_.1} parent=42 // loop_footer
                  %s233 = sadd.s32 1, %s229
                $region49: #{_lambda_.1} parent=42 // loop_footer_branch
                  %228 = sbr.rel target = $region45
                $region50: #{_lambda_.1} parent=42 // loop_exit
                  _
              $region43: #{_lambda_.1} parent=27 // pred_fallthru
                _
              // Predicated region
              $region51: #{_lambda_.1} parent=27 // pred_check
                _
              $region52: #{_lambda_.1} parent=27 // pred_check_branch
                %333 = sbr.rel target = $region54
              $region53: #{_lambda_.1} parent=27 // pred_region
                _
              $region54: #{_lambda_.1} parent=27 // pred_fallthru
                _
            $region28: #{_lambda_.1} parent=23 // pred_fallthru
              _
            // Predicated region
            $region29: #{_lambda_.1} parent=23 // pred_check
              _
            $region30: #{_lambda_.1} parent=23 // pred_check_branch
              %120 = sbr.rel target = $region32
            $region31: #{_lambda_.1} parent=23 // pred_region
              loop: start=0, step=1, limit=1
              $region33: #{_lambda_.1} parent=31 // loop_pre_header
                _
              $region34: #{_lambda_.1} parent=31 // loop_header
                %s123 = sphi 0, %s127
                %p124 = scmp.ge.s32.totalorder %s123, 1
                %s128 = sphi %s114, %s114
                %s129 = sphi %s111, %s111
              $region35: #{_lambda_.1} parent=31 // loop_header_branch
                %126 = sbr.rel (%p124) target = $region39
              $region36: #{_lambda_.1} parent=31 // loop_body
                %v130 = vld [vmem:[%s128] sm:$0xff]
                %131 = vst [vmem:[%s129] sm:$0xff] %v130
                %v132 = vld [vmem:[%s128 + $0x8] sm:$0xff]
                %133 = vst [vmem:[%s129 + $0x8] sm:$0xff] %v132
                %v134 = vld [vmem:[%s128 + $0x10] sm:$0xff]
                %135 = vst [vmem:[%s129 + $0x10] sm:$0xff] %v134
                %v136 = vld [vmem:[%s128 + $0x18] sm:$0xff]
                %137 = vst [vmem:[%s129 + $0x18] sm:$0xff] %v136
                %v138 = vld [vmem:[%s128 + $0x40] sm:$0xff]
                %139 = vst [vmem:[%s129 + $0x20] sm:$0xff] %v138
                %v140 = vld [vmem:[%s128 + $0x48] sm:$0xff]
                %141 = vst [vmem:[%s129 + $0x28] sm:$0xff] %v140
                %v142 = vld [vmem:[%s128 + $0x50] sm:$0xff]
                %143 = vst [vmem:[%s129 + $0x30] sm:$0xff] %v142
                %v144 = vld [vmem:[%s128 + $0x58] sm:$0xff]
                %145 = vst [vmem:[%s129 + $0x38] sm:$0xff] %v144
                %v146 = vld [vmem:[%s128 + $0x80] sm:$0xff]
                %147 = vst [vmem:[%s129 + $0x40] sm:$0xff] %v146
                %v148 = vld [vmem:[%s128 + $0x88] sm:$0xff]
                %149 = vst [vmem:[%s129 + $0x48] sm:$0xff] %v148
                %v150 = vld [vmem:[%s128 + $0x90] sm:$0xff]
                %151 = vst [vmem:[%s129 + $0x50] sm:$0xff] %v150
                %v152 = vld [vmem:[%s128 + $0x98] sm:$0xff]
                %153 = vst [vmem:[%s129 + $0x58] sm:$0xff] %v152
                %v154 = vld [vmem:[%s128 + $0xc0] sm:$0xff]
                %155 = vst [vmem:[%s129 + $0x60] sm:$0xff] %v154
                %v156 = vld [vmem:[%s128 + $0xc8] sm:$0xff]
                %157 = vst [vmem:[%s129 + $0x68] sm:$0xff] %v156
                %v158 = vld [vmem:[%s128 + $0xd0] sm:$0xff]
                %159 = vst [vmem:[%s129 + $0x70] sm:$0xff] %v158
                %v160 = vld [vmem:[%s128 + $0xd8] sm:$0xff]
                %161 = vst [vmem:[%s129 + $0x78] sm:$0xff] %v160
                %v162 = vld [vmem:[%s128 + $0x100] sm:$0xff]
                %163 = vst [vmem:[%s129 + $0x80] sm:$0xff] %v162
                %v164 = vld [vmem:[%s128 + $0x108] sm:$0xff]
                %165 = vst [vmem:[%s129 + $0x88] sm:$0xff] %v164
                %v166 = vld [vmem:[%s128 + $0x110] sm:$0xff]
                %167 = vst [vmem:[%s129 + $0x90] sm:$0xff] %v166
                %v168 = vld [vmem:[%s128 + $0x118] sm:$0xff]
                %169 = vst [vmem:[%s129 + $0x98] sm:$0xff] %v168
                %v170 = vld [vmem:[%s128 + $0x140] sm:$0xff]
                %171 = vst [vmem:[%s129 + $0xa0] sm:$0xff] %v170
                %v172 = vld [vmem:[%s128 + $0x148] sm:$0xff]
                %173 = vst [vmem:[%s129 + $0xa8] sm:$0xff] %v172
                %v174 = vld [vmem:[%s128 + $0x150] sm:$0xff]
                %175 = vst [vmem:[%s129 + $0xb0] sm:$0xff] %v174
                %v176 = vld [vmem:[%s128 + $0x158] sm:$0xff]
                %177 = vst [vmem:[%s129 + $0xb8] sm:$0xff] %v176
                %v178 = vld [vmem:[%s128 + $0x180] sm:$0xff]
                %179 = vst [vmem:[%s129 + $0xc0] sm:$0xff] %v178
                %v180 = vld [vmem:[%s128 + $0x188] sm:$0xff]
                %181 = vst [vmem:[%s129 + $0xc8] sm:$0xff] %v180
                %v182 = vld [vmem:[%s128 + $0x190] sm:$0xff]
                %183 = vst [vmem:[%s129 + $0xd0] sm:$0xff] %v182
                %v184 = vld [vmem:[%s128 + $0x198] sm:$0xff]
                %185 = vst [vmem:[%s129 + $0xd8] sm:$0xff] %v184
                %v186 = vld [vmem:[%s128 + $0x1c0] sm:$0xff]
                %187 = vst [vmem:[%s129 + $0xe0] sm:$0xff] %v186
                %v188 = vld [vmem:[%s128 + $0x1c8] sm:$0xff]
                %189 = vst [vmem:[%s129 + $0xe8] sm:$0xff] %v188
                %v190 = vld [vmem:[%s128 + $0x1d0] sm:$0xff]
                %191 = vst [vmem:[%s129 + $0xf0] sm:$0xff] %v190
                %v192 = vld [vmem:[%s128 + $0x1d8] sm:$0xff]
                %193 = vst [vmem:[%s129 + $0xf8] sm:$0xff] %v192
                %v194 = vld [vmem:[%s128 + $0x200] sm:$0xff]
                %195 = vst [vmem:[%s129 + $0x100] sm:$0xff] %v194
                %v196 = vld [vmem:[%s128 + $0x208] sm:$0xff]
                %197 = vst [vmem:[%s129 + $0x108] sm:$0xff] %v196
                %v198 = vld [vmem:[%s128 + $0x210] sm:$0xff]
                %199 = vst [vmem:[%s129 + $0x110] sm:$0xff] %v198
                %v200 = vld [vmem:[%s128 + $0x218] sm:$0xff]
                %201 = vst [vmem:[%s129 + $0x118] sm:$0xff] %v200
                %v202 = vld [vmem:[%s128 + $0x240] sm:$0xff]
                %203 = vst [vmem:[%s129 + $0x120] sm:$0xff] %v202
                %v204 = vld [vmem:[%s128 + $0x248] sm:$0xff]
                %205 = vst [vmem:[%s129 + $0x128] sm:$0xff] %v204
                %v206 = vld [vmem:[%s128 + $0x250] sm:$0xff]
                %207 = vst [vmem:[%s129 + $0x130] sm:$0xff] %v206
                %v208 = vld [vmem:[%s128 + $0x258] sm:$0xff]
                %209 = vst [vmem:[%s129 + $0x138] sm:$0xff] %v208
                %v210 = vld [vmem:[%s128 + $0x280] sm:$0xff]
                %211 = vst [vmem:[%s129 + $0x140] sm:$0xff] %v210
                %v212 = vld [vmem:[%s128 + $0x288] sm:$0xff]
                %213 = vst [vmem:[%s129 + $0x148] sm:$0xff] %v212
                %v214 = vld [vmem:[%s128 + $0x290] sm:$0xff]
                %215 = vst [vmem:[%s129 + $0x150] sm:$0xff] %v214
                %v216 = vld [vmem:[%s128 + $0x298] sm:$0xff]
                %217 = vst [vmem:[%s129 + $0x158] sm:$0xff] %v216
                %v218 = vld [vmem:[%s128 + $0x2c0] sm:$0xff]
                %219 = vst [vmem:[%s129 + $0x160] sm:$0xff] %v218
                %v220 = vld [vmem:[%s128 + $0x2c8] sm:$0xff]
                %221 = vst [vmem:[%s129 + $0x168] sm:$0xff] %v220
                %v222 = vld [vmem:[%s128 + $0x2d0] sm:$0xff]
                %223 = vst [vmem:[%s129 + $0x170] sm:$0xff] %v222
                %v224 = vld [vmem:[%s128 + $0x2d8] sm:$0xff]
                %225 = vst [vmem:[%s129 + $0x178] sm:$0xff] %v224
              $region37: #{_lambda_.1} parent=31 // loop_footer
                %s127 = sadd.s32 1, %s123
              $region38: #{_lambda_.1} parent=31 // loop_footer_branch
                %122 = sbr.rel target = $region34
              $region39: #{_lambda_.1} parent=31 // loop_exit
                _
            $region32: #{_lambda_.1} parent=23 // pred_fallthru
              _
          $region24: #{_lambda_.1} parent=19 // pred_fallthru
            _
          %334 = vnop
        $region20: #{_lambda_.1} parent=15 // pred_fallthru
          _
        // Predicated region
        $region55: #{_lambda_.1} parent=15 // pred_check
          %p335 = pneg %p54
        $region56: #{_lambda_.1} parent=15 // pred_check_branch
          %337 = sbr.rel (%p335) target = $region58
        $region57: #{_lambda_.1} parent=15 // pred_region
          %s338 = sand.u32 %s44, 1
          %s339 = sand.u32 %s44, 1
          %s340 = smul.addr %s339, 64
          %s341 = scalar_lea.vmem [#allocation3], %s340
          %s342 = smul.u32 4, %s8
          %s343 = smul.addr %s342, 4
          %s344 = scalar_lea.vmem %s1, %s343
          // Predicated region
          $region59: #{_lambda_.1} parent=57 // pred_check
            _
          $region60: #{_lambda_.1} parent=57 // pred_check_branch
            %346 = sbr.rel (0) target = $region62
          $region61: #{_lambda_.1} parent=57 // pred_region
            // Predicated region
            $region63: #{_lambda_.1} parent=61 // pred_check
              _
            $region64: #{_lambda_.1} parent=61 // pred_check_branch
              %348 = sbr.rel target = $region66
            $region65: #{_lambda_.1} parent=61 // pred_region
              // Predicated region
              $region78: #{_lambda_.1} parent=65 // pred_check
                _
              $region79: #{_lambda_.1} parent=65 // pred_check_branch
                %393 = sbr.rel (0) target = $region81
              $region80: #{_lambda_.1} parent=65 // pred_region
                loop: start=0, step=1, limit=1
                $region82: #{_lambda_.1} parent=80 // loop_pre_header
                  _
                $region83: #{_lambda_.1} parent=80 // loop_header
                  %s395 = sphi 0, %s399
                  %p396 = scmp.ge.s32.totalorder %s395, 1
                  %s400 = sphi %s344, %s344
                  %s401 = sphi %s341, %s341
                $region84: #{_lambda_.1} parent=80 // loop_header_branch
                  %398 = sbr.rel (%p396) target = $region88
                $region85: #{_lambda_.1} parent=80 // loop_body
                  _
                $region86: #{_lambda_.1} parent=80 // loop_footer
                  %s399 = sadd.s32 1, %s395
                $region87: #{_lambda_.1} parent=80 // loop_footer_branch
                  %394 = sbr.rel target = $region83
                $region88: #{_lambda_.1} parent=80 // loop_exit
                  _
                loop: start=0, step=1, limit=1
                $region89: #{_lambda_.1} parent=80 // loop_pre_header
                  _
                $region90: #{_lambda_.1} parent=80 // loop_header
                  %s404 = sphi 0, %s408
                  %p405 = scmp.ge.s32.totalorder %s404, 1
                  %s409 = sphi %s344, %s344
                  %s410 = sphi %s341, %s341
                $region91: #{_lambda_.1} parent=80 // loop_header_branch
                  %407 = sbr.rel (%p405) target = $region95
                $region92: #{_lambda_.1} parent=80 // loop_body
                  %v411 = vld [vmem:[%s409] sm:$0xf]
                  %412 = vst [vmem:[%s410] sm:$0xf] %v411
                  %v413 = vld [vmem:[%s409 + $0x4] sm:$0xf]
                  %414 = vst [vmem:[%s410 + $0x4] sm:$0xf] %v413
                  %v415 = vld [vmem:[%s409 + $0x8] sm:$0xf]
                  %416 = vst [vmem:[%s410 + $0x8] sm:$0xf] %v415
                  %v417 = vld [vmem:[%s409 + $0xc] sm:$0xf]
                  %418 = vst [vmem:[%s410 + $0xc] sm:$0xf] %v417
                  %v419 = vld [vmem:[%s409 + $0x20] sm:$0xf]
                  %420 = vst [vmem:[%s410 + $0x10] sm:$0xf] %v419
                  %v421 = vld [vmem:[%s409 + $0x24] sm:$0xf]
                  %422 = vst [vmem:[%s410 + $0x14] sm:$0xf] %v421
                  %v423 = vld [vmem:[%s409 + $0x28] sm:$0xf]
                  %424 = vst [vmem:[%s410 + $0x18] sm:$0xf] %v423
                  %v425 = vld [vmem:[%s409 + $0x2c] sm:$0xf]
                  %426 = vst [vmem:[%s410 + $0x1c] sm:$0xf] %v425
                  %v427 = vld [vmem:[%s409 + $0x40] sm:$0xf]
                  %428 = vst [vmem:[%s410 + $0x20] sm:$0xf] %v427
                  %v429 = vld [vmem:[%s409 + $0x44] sm:$0xf]
                  %430 = vst [vmem:[%s410 + $0x24] sm:$0xf] %v429
                  %v431 = vld [vmem:[%s409 + $0x48] sm:$0xf]
                  %432 = vst [vmem:[%s410 + $0x28] sm:$0xf] %v431
                  %v433 = vld [vmem:[%s409 + $0x4c] sm:$0xf]
                  %434 = vst [vmem:[%s410 + $0x2c] sm:$0xf] %v433
                  %v435 = vld [vmem:[%s409 + $0x60] sm:$0xf]
                  %436 = vst [vmem:[%s410 + $0x30] sm:$0xf] %v435
                  %v437 = vld [vmem:[%s409 + $0x64] sm:$0xf]
                  %438 = vst [vmem:[%s410 + $0x34] sm:$0xf] %v437
                  %v439 = vld [vmem:[%s409 + $0x68] sm:$0xf]
                  %440 = vst [vmem:[%s410 + $0x38] sm:$0xf] %v439
                  %v441 = vld [vmem:[%s409 + $0x6c] sm:$0xf]
                  %442 = vst [vmem:[%s410 + $0x3c] sm:$0xf] %v441
                $region93: #{_lambda_.1} parent=80 // loop_footer
                  %s408 = sadd.s32 1, %s404
                $region94: #{_lambda_.1} parent=80 // loop_footer_branch
                  %403 = sbr.rel target = $region90
                $region95: #{_lambda_.1} parent=80 // loop_exit
                  _
              $region81: #{_lambda_.1} parent=65 // pred_fallthru
                _
            $region66: #{_lambda_.1} parent=61 // pred_fallthru
              _
            // Predicated region
            $region67: #{_lambda_.1} parent=61 // pred_check
              _
            $region68: #{_lambda_.1} parent=61 // pred_check_branch
              %350 = sbr.rel (0) target = $region70
            $region69: #{_lambda_.1} parent=61 // pred_region
              loop: start=0, step=1, limit=1
              $region71: #{_lambda_.1} parent=69 // loop_pre_header
                _
              $region72: #{_lambda_.1} parent=69 // loop_header
                %s353 = sphi 0, %s357
                %p354 = scmp.ge.s32.totalorder %s353, 1
                %s358 = sphi %s344, %s344
                %s359 = sphi %s341, %s341
              $region73: #{_lambda_.1} parent=69 // loop_header_branch
                %356 = sbr.rel (%p354) target = $region77
              $region74: #{_lambda_.1} parent=69 // loop_body
                %v360 = vld [vmem:[%s358] sm:$0xf]
                %361 = vst [vmem:[%s359] sm:$0xf] %v360
                %v362 = vld [vmem:[%s358 + $0x4] sm:$0xf]
                %363 = vst [vmem:[%s359 + $0x4] sm:$0xf] %v362
                %v364 = vld [vmem:[%s358 + $0x8] sm:$0xf]
                %365 = vst [vmem:[%s359 + $0x8] sm:$0xf] %v364
                %v366 = vld [vmem:[%s358 + $0xc] sm:$0xf]
                %367 = vst [vmem:[%s359 + $0xc] sm:$0xf] %v366
                %v368 = vld [vmem:[%s358 + $0x20] sm:$0xf]
                %369 = vst [vmem:[%s359 + $0x10] sm:$0xf] %v368
                %v370 = vld [vmem:[%s358 + $0x24] sm:$0xf]
                %371 = vst [vmem:[%s359 + $0x14] sm:$0xf] %v370
                %v372 = vld [vmem:[%s358 + $0x28] sm:$0xf]
                %373 = vst [vmem:[%s359 + $0x18] sm:$0xf] %v372
                %v374 = vld [vmem:[%s358 + $0x2c] sm:$0xf]
                %375 = vst [vmem:[%s359 + $0x1c] sm:$0xf] %v374
                %v376 = vld [vmem:[%s358 + $0x40] sm:$0xf]
                %377 = vst [vmem:[%s359 + $0x20] sm:$0xf] %v376
                %v378 = vld [vmem:[%s358 + $0x44] sm:$0xf]
                %379 = vst [vmem:[%s359 + $0x24] sm:$0xf] %v378
                %v380 = vld [vmem:[%s358 + $0x48] sm:$0xf]
                %381 = vst [vmem:[%s359 + $0x28] sm:$0xf] %v380
                %v382 = vld [vmem:[%s358 + $0x4c] sm:$0xf]
                %383 = vst [vmem:[%s359 + $0x2c] sm:$0xf] %v382
                %v384 = vld [vmem:[%s358 + $0x60] sm:$0xf]
                %385 = vst [vmem:[%s359 + $0x30] sm:$0xf] %v384
                %v386 = vld [vmem:[%s358 + $0x64] sm:$0xf]
                %387 = vst [vmem:[%s359 + $0x34] sm:$0xf] %v386
                %v388 = vld [vmem:[%s358 + $0x68] sm:$0xf]
                %389 = vst [vmem:[%s359 + $0x38] sm:$0xf] %v388
                %v390 = vld [vmem:[%s358 + $0x6c] sm:$0xf]
                %391 = vst [vmem:[%s359 + $0x3c] sm:$0xf] %v390
              $region75: #{_lambda_.1} parent=69 // loop_footer
                %s357 = sadd.s32 1, %s353
              $region76: #{_lambda_.1} parent=69 // loop_footer_branch
                %352 = sbr.rel target = $region72
              $region77: #{_lambda_.1} parent=69 // loop_exit
                _
            $region70: #{_lambda_.1} parent=61 // pred_fallthru
              _
          $region62: #{_lambda_.1} parent=57 // pred_fallthru
            _
          %443 = vnop
        $region58: #{_lambda_.1} parent=15 // pred_fallthru
          _
      $region16: #{_lambda_.1} parent=5 // pred_fallthru
        _
      %p444 = scmp.le.s32.totalorder 1, %s8
      %p445 = scmp.lt.s32.totalorder %s8, 3
      %p446 = pnand %p444, %p445
      %p447 = pneg %p446
      // Predicated region
      $region96: #{_lambda_.1} parent=5 // pred_check
        _
      $region97: #{_lambda_.1} parent=5 // pred_check_branch
        %449 = sbr.rel (%p446) target = $region99
      $region98: #{_lambda_.1} parent=5 // pred_region
        %s450 = ssub.s32 %s8, 1
        %s451 = sand.u32 %s21, 1
        %s452 = sand.u32 %s21, 1
        %s453 = smul.addr %s452, 384
        %s454 = scalar_lea.vmem [#allocation2], %s453
        // Predicated region
        $region100: #{_lambda_.1} parent=98 // pred_check
          %p455 = pneg %p34
        $region101: #{_lambda_.1} parent=98 // pred_check_branch
          %457 = sbr.rel (%p455) target = $region103
        $region102: #{_lambda_.1} parent=98 // pred_region
          _
        $region103: #{_lambda_.1} parent=98 // pred_fallthru
          _
        %s458 = sand.u32 %s47, 1
        %s459 = sand.u32 %s47, 1
        %s460 = smul.addr %s459, 64
        %s461 = scalar_lea.vmem [#allocation3], %s460
        // Predicated region
        $region104: #{_lambda_.1} parent=98 // pred_check
          %p462 = pneg %p60
        $region105: #{_lambda_.1} parent=98 // pred_check_branch
          %464 = sbr.rel (%p462) target = $region107
        $region106: #{_lambda_.1} parent=98 // pred_region
          _
        $region107: #{_lambda_.1} parent=98 // pred_fallthru
          _
        %s465 = sand.u32 %s21, 1
        %s466 = sand.u32 %s21, 1
        %s467 = smul.addr %s466, 384
        %s468 = scalar_lea.vmem [#allocation2], %s467
        %p469 = pneg %p34
        %p470 = pneg %p31
        %s471 = sand.u32 %s47, 1
        %s472 = sand.u32 %s47, 1
        %s473 = smul.addr %s472, 64
        %s474 = scalar_lea.vmem [#allocation3], %s473
        %p475 = pneg %p60
        %p476 = pneg %p57
        %p477 = pneg %p86
        %p478 = pneg %p83
        %s479 = smul.u32 4, %s13
        %p480 = scmp.lt.s32.totalorder %s479, 7
        %s481 = scalar_select %p480, %s479, 7
        %s482 = smul.addr %s481, 8
        %s483 = scalar_lea.vmem %s2, %s482
        %s484 = smul.u32 4, %s13
        %s485 = smul.u32 4, %s13
        %s486 = smul.u32 4, %s13
        %p487 = scmp.lt.s32.totalorder %s486, 7
        %s488 = scalar_select %p487, %s486, 7
        %s489 = smul.addr %s488, 8
        %s490 = scalar_lea.vmem %s2, %s489
        %s491 = smul.u32 4, %s13
        %v492 = vld [vmem:[%s454] sm:$0xff]
        %v493 = vld [vmem:[%s454 + $0x8] sm:$0xff]
        %v494 = vld [vmem:[%s454 + $0x10] sm:$0xff]
        %v495 = vld [vmem:[%s454 + $0x18] sm:$0xff]
        %s496 = scalar_lea.vmem %s454, 32 [#allocation2]
        %v497 = vld [vmem:[%s496] sm:$0xff]
        %v498 = vld [vmem:[%s496 + $0x8] sm:$0xff]
        %v499 = vld [vmem:[%s496 + $0x10] sm:$0xff]
        %v500 = vld [vmem:[%s496 + $0x18] sm:$0xff]
        %s501 = scalar_lea.vmem %s454, 64 [#allocation2]
        %v502 = vld [vmem:[%s501] sm:$0xff]
        %v503 = vld [vmem:[%s501 + $0x8] sm:$0xff]
        %v504 = vld [vmem:[%s501 + $0x10] sm:$0xff]
        %v505 = vld [vmem:[%s501 + $0x18] sm:$0xff]
        %s506 = scalar_lea.vmem %s454, 96 [#allocation2]
        %v507 = vld [vmem:[%s506] sm:$0xff]
        %v508 = vld [vmem:[%s506 + $0x8] sm:$0xff]
        %v509 = vld [vmem:[%s506 + $0x10] sm:$0xff]
        %v510 = vld [vmem:[%s506 + $0x18] sm:$0xff]
        %s511 = scalar_lea.vmem %s454, 128 [#allocation2]
        %v512 = vld [vmem:[%s511] sm:$0xff]
        %v513 = vld [vmem:[%s511 + $0x8] sm:$0xff]
        %v514 = vld [vmem:[%s511 + $0x10] sm:$0xff]
        %v515 = vld [vmem:[%s511 + $0x18] sm:$0xff]
        %s516 = scalar_lea.vmem %s454, 160 [#allocation2]
        %v517 = vld [vmem:[%s516] sm:$0xff]
        %v518 = vld [vmem:[%s516 + $0x8] sm:$0xff]
        %v519 = vld [vmem:[%s516 + $0x10] sm:$0xff]
        %v520 = vld [vmem:[%s516 + $0x18] sm:$0xff]
        %s521 = scalar_lea.vmem %s454, 192 [#allocation2]
        %v522 = vld [vmem:[%s521] sm:$0xff]
        %v523 = vld [vmem:[%s521 + $0x8] sm:$0xff]
        %v524 = vld [vmem:[%s521 + $0x10] sm:$0xff]
        %v525 = vld [vmem:[%s521 + $0x18] sm:$0xff]
        %s526 = scalar_lea.vmem %s454, 224 [#allocation2]
        %v527 = vld [vmem:[%s526] sm:$0xff]
        %v528 = vld [vmem:[%s526 + $0x8] sm:$0xff]
        %v529 = vld [vmem:[%s526 + $0x10] sm:$0xff]
        %v530 = vld [vmem:[%s526 + $0x18] sm:$0xff]
        %s531 = scalar_lea.vmem %s454, 256 [#allocation2]
        %v532 = vld [vmem:[%s531] sm:$0xff]
        %v533 = vld [vmem:[%s531 + $0x8] sm:$0xff]
        %v534 = vld [vmem:[%s531 + $0x10] sm:$0xff]
        %v535 = vld [vmem:[%s531 + $0x18] sm:$0xff]
        %s536 = scalar_lea.vmem %s454, 288 [#allocation2]
        %v537 = vld [vmem:[%s536] sm:$0xff]
        %v538 = vld [vmem:[%s536 + $0x8] sm:$0xff]
        %v539 = vld [vmem:[%s536 + $0x10] sm:$0xff]
        %v540 = vld [vmem:[%s536 + $0x18] sm:$0xff]
        %s541 = scalar_lea.vmem %s454, 320 [#allocation2]
        %v542 = vld [vmem:[%s541] sm:$0xff]
        %v543 = vld [vmem:[%s541 + $0x8] sm:$0xff]
        %v544 = vld [vmem:[%s541 + $0x10] sm:$0xff]
        %v545 = vld [vmem:[%s541 + $0x18] sm:$0xff]
        %s546 = scalar_lea.vmem %s454, 352 [#allocation2]
        %v547 = vld [vmem:[%s546] sm:$0xff]
        %v548 = vld [vmem:[%s546 + $0x8] sm:$0xff]
        %v549 = vld [vmem:[%s546 + $0x10] sm:$0xff]
        %v550 = vld [vmem:[%s546 + $0x18] sm:$0xff]
        %vm551 = vcmp.gt.f32.partialorder %v532, 0.5
        %vm552 = vcmp.gt.f32.partialorder %v533, 0.5
        %vm553 = vcmp.gt.f32.partialorder %v534, 0.5
        %vm554 = vcmp.gt.f32.partialorder %v535, 0.5
        %v555 = vmul.f32 %v502, 0.5
        %v556 = vmul.f32 %v503, 0.5
        %v557 = vmul.f32 %v504, 0.5
        %v558 = vmul.f32 %v505, 0.5
        %v559 = vsub.f32 %v492, %v555
        %v560 = vsub.f32 %v493, %v556
        %v561 = vsub.f32 %v494, %v557
        %v562 = vsub.f32 %v495, %v558
        %v563 = vadd.f32 %v492, %v555
        %v564 = vadd.f32 %v493, %v556
        %v565 = vadd.f32 %v494, %v557
        %v566 = vadd.f32 %v495, %v558
        %v567 = vmul.f32 %v507, 0.5
        %v568 = vmul.f32 %v508, 0.5
        %v569 = vmul.f32 %v509, 0.5
        %v570 = vmul.f32 %v510, 0.5
        %v571 = vsub.f32 %v497, %v567
        %v572 = vsub.f32 %v498, %v568
        %v573 = vsub.f32 %v499, %v569
        %v574 = vsub.f32 %v500, %v570
        %v575 = vadd.f32 %v497, %v567
        %v576 = vadd.f32 %v498, %v568
        %v577 = vadd.f32 %v499, %v569
        %v578 = vadd.f32 %v500, %v570
        %v579 = vmul.f32 %v522, 0.5
        %v580 = vmul.f32 %v523, 0.5
        %v581 = vmul.f32 %v524, 0.5
        %v582 = vmul.f32 %v525, 0.5
        %v583 = vsub.f32 %v512, %v579
        %v584 = vsub.f32 %v513, %v580
        %v585 = vsub.f32 %v514, %v581
        %v586 = vsub.f32 %v515, %v582
        %v587 = vadd.f32 %v512, %v579
        %v588 = vadd.f32 %v513, %v580
        %v589 = vadd.f32 %v514, %v581
        %v590 = vadd.f32 %v515, %v582
        %v591 = vmul.f32 %v527, 0.5
        %v592 = vmul.f32 %v528, 0.5
        %v593 = vmul.f32 %v529, 0.5
        %v594 = vmul.f32 %v530, 0.5
        %v595 = vsub.f32 %v517, %v591
        %v596 = vsub.f32 %v518, %v592
        %v597 = vsub.f32 %v519, %v593
        %v598 = vsub.f32 %v520, %v594
        %v599 = vadd.f32 %v517, %v591
        %v600 = vadd.f32 %v518, %v592
        %v601 = vadd.f32 %v519, %v593
        %v602 = vadd.f32 %v520, %v594
        %v603 = vmin.f32 %v563, %v587
        %v604 = vmin.f32 %v564, %v588
        %v605 = vmin.f32 %v565, %v589
        %v606 = vmin.f32 %v566, %v590
        %v607 = vmax.f32 %v559, %v583
        %v608 = vmax.f32 %v560, %v584
        %v609 = vmax.f32 %v561, %v585
        %v610 = vmax.f32 %v562, %v586
        %v611 = vsub.f32 %v603, %v607
        %v612 = vsub.f32 %v604, %v608
        %v613 = vsub.f32 %v605, %v609
        %v614 = vsub.f32 %v606, %v610
        %v615 = vmax.f32 %v611, 0.0
        %v616 = vmax.f32 %v612, 0.0
        %v617 = vmax.f32 %v613, 0.0
        %v618 = vmax.f32 %v614, 0.0
        %v619 = vmin.f32 %v575, %v599
        %v620 = vmin.f32 %v576, %v600
        %v621 = vmin.f32 %v577, %v601
        %v622 = vmin.f32 %v578, %v602
        %v623 = vmax.f32 %v571, %v595
        %v624 = vmax.f32 %v572, %v596
        %v625 = vmax.f32 %v573, %v597
        %v626 = vmax.f32 %v574, %v598
        %v627 = vsub.f32 %v619, %v623
        %v628 = vsub.f32 %v620, %v624
        %v629 = vsub.f32 %v621, %v625
        %v630 = vsub.f32 %v622, %v626
        %v631 = vmax.f32 %v627, 0.0
        %v632 = vmax.f32 %v628, 0.0
        %v633 = vmax.f32 %v629, 0.0
        %v634 = vmax.f32 %v630, 0.0
        %v635 = vmul.f32 %v615, %v631
        %v636 = vmul.f32 %v616, %v632
        %v637 = vmul.f32 %v617, %v633
        %v638 = vmul.f32 %v618, %v634
        %v639 = vmul.f32 %v502, %v507
        %v640 = vmul.f32 %v503, %v508
        %v641 = vmul.f32 %v504, %v509
        %v642 = vmul.f32 %v505, %v510
        %v643 = vmul.f32 %v522, %v527
        %v644 = vmul.f32 %v523, %v528
        %v645 = vmul.f32 %v524, %v529
        %v646 = vmul.f32 %v525, %v530
        %v647 = vadd.f32 %v639, %v643
        %v648 = vadd.f32 %v640, %v644
        %v649 = vadd.f32 %v641, %v645
        %v650 = vadd.f32 %v642, %v646
        %v651 = vsub.f32 %v647, %v635
        %v652 = vsub.f32 %v648, %v636
        %v653 = vsub.f32 %v649, %v637
        %v654 = vsub.f32 %v650, %v638
        %v655 = vadd.f32 %v651, 1e-09
        %v656 = vadd.f32 %v652, 1e-09
        %v657 = vadd.f32 %v653, 1e-09
        %v658 = vadd.f32 %v654, 1e-09
        %v659 = vrcp.pop %v655
        %v660 = vmul.f32 %v635, %v659
        %v661 = vrcp.pop %v656
        %v662 = vmul.f32 %v636, %v661
        %v663 = vrcp.pop %v657
        %v664 = vmul.f32 %v637, %v663
        %v665 = vrcp.pop %v658
        %v666 = vmul.f32 %v638, %v665
        %v667 = vmax.f32 %v563, %v587
        %v668 = vmax.f32 %v564, %v588
        %v669 = vmax.f32 %v565, %v589
        %v670 = vmax.f32 %v566, %v590
        %v671 = vmin.f32 %v559, %v583
        %v672 = vmin.f32 %v560, %v584
        %v673 = vmin.f32 %v561, %v585
        %v674 = vmin.f32 %v562, %v586
        %v675 = vsub.f32 %v667, %v671
        %v676 = vsub.f32 %v668, %v672
        %v677 = vsub.f32 %v669, %v673
        %v678 = vsub.f32 %v670, %v674
        %v679 = vmax.f32 %v675, 0.0
        %v680 = vmax.f32 %v676, 0.0
        %v681 = vmax.f32 %v677, 0.0
        %v682 = vmax.f32 %v678, 0.0
        %v683 = vmax.f32 %v575, %v599
        %v684 = vmax.f32 %v576, %v600
        %v685 = vmax.f32 %v577, %v601
        %v686 = vmax.f32 %v578, %v602
        %v687 = vmin.f32 %v571, %v595
        %v688 = vmin.f32 %v572, %v596
        %v689 = vmin.f32 %v573, %v597
        %v690 = vmin.f32 %v574, %v598
        %v691 = vsub.f32 %v683, %v687
        %v692 = vsub.f32 %v684, %v688
        %v693 = vsub.f32 %v685, %v689
        %v694 = vsub.f32 %v686, %v690
        %v695 = vmax.f32 %v691, 0.0
        %v696 = vmax.f32 %v692, 0.0
        %v697 = vmax.f32 %v693, 0.0
        %v698 = vmax.f32 %v694, 0.0
        %v699 = vmul.f32 %v679, %v695
        %v700 = vmul.f32 %v680, %v696
        %v701 = vmul.f32 %v681, %v697
        %v702 = vmul.f32 %v682, %v698
        %v703 = vsub.f32 %v699, %v651
        %v704 = vsub.f32 %v700, %v652
        %v705 = vsub.f32 %v701, %v653
        %v706 = vsub.f32 %v702, %v654
        %v707 = vadd.f32 %v699, 1e-09
        %v708 = vadd.f32 %v700, 1e-09
        %v709 = vadd.f32 %v701, 1e-09
        %v710 = vadd.f32 %v702, 1e-09
        %v711 = vrcp.pop %v707
        %v712 = vmul.f32 %v703, %v711
        %v713 = vrcp.pop %v708
        %v714 = vmul.f32 %v704, %v713
        %v715 = vrcp.pop %v709
        %v716 = vmul.f32 %v705, %v715
        %v717 = vrcp.pop %v710
        %v718 = vmul.f32 %v706, %v717
        %v719 = vsub.f32 %v660, %v712
        %v720 = vsub.f32 %v662, %v714
        %v721 = vsub.f32 %v664, %v716
        %v722 = vsub.f32 %v666, %v718
        %v723 = vsub.f32 1.0, %v719
        %v724 = vsub.f32 1.0, %v720
        %v725 = vsub.f32 1.0, %v721
        %v726 = vsub.f32 1.0, %v722
        %v727 = vsel %vm551, %v723, 0.0
        %v728 = vsel %vm552, %v724, 0.0
        %v729 = vsel %vm553, %v725, 0.0
        %v730 = vsel %vm554, %v726, 0.0
        loop: start=0, step=1, limit=4
        $region108: #{_lambda_.1} parent=98 // loop_pre_header
          _
        $region109: #{_lambda_.1} parent=98 // loop_header
          %s732 = sphi 0, %s736
          %p733 = scmp.ge.s32.totalorder %s732, 4
          %v737 = vphi 0.0, %v782
          %v738 = vphi 0.0, %v783
          %v739 = vphi 0.0, %v784
          %v740 = vphi 0.0, %v785
        $region110: #{_lambda_.1} parent=98 // loop_header_branch
          %735 = sbr.rel (%p733) target = $region114
        $region111: #{_lambda_.1} parent=98 // loop_body
          %s741 = smul.u32 %s732, 4
          %s742 = smul.addr %s741, 4
          %s743 = scalar_lea.vmem %s461, %s742 [#allocation3]
          %v744 = vld [vmem:[%s743] sm:$0xf]
          %v745 = vld [vmem:[%s743 + $0x4] sm:$0xf]
          %v746 = vld [vmem:[%s743 + $0x8] sm:$0xf]
          %v747 = vld [vmem:[%s743 + $0xc] sm:$0xf]
          %v748 = vunpack.c.l.bf16 %v744
          %v749 = vunpack.c.l.bf16 %v745
          %v750 = vunpack.c.l.bf16 %v746
          %v751 = vunpack.c.l.bf16 %v747
          %s752 = scvt.s32.f32 %s732
          %v753 = vstv %s752
          %vm754 = vcmp.eq.f32.partialorder %v547, %v753
          %vm755 = vcmp.eq.f32.partialorder %v548, %v753
          %vm756 = vcmp.eq.f32.partialorder %v549, %v753
          %vm757 = vcmp.eq.f32.partialorder %v550, %v753
          %v758 = vsub.f32 1.0, %v748
          %v759 = vsub.f32 1.0, %v749
          %v760 = vsub.f32 1.0, %v750
          %v761 = vsub.f32 1.0, %v751
          %v762 = vsel %vm754, %v748, %v758
          %v763 = vsel %vm755, %v749, %v759
          %v764 = vsel %vm756, %v750, %v760
          %v765 = vsel %vm757, %v751, %v761
          %v766 = vmax.f32 %v762, 1e-07
          %v767 = vmax.f32 %v763, 1e-07
          %v768 = vmax.f32 %v764, 1e-07
          %v769 = vmax.f32 %v765, 1e-07
          %v770 = vmin.f32 %v766, 0.9999999
          %v771 = vmin.f32 %v767, 0.9999999
          %v772 = vmin.f32 %v768, 0.9999999
          %v773 = vmin.f32 %v769, 0.9999999
          %v774 = vlog2.pop %v770
          %v775 = vmul.f32 %v774, 0.6931472
          %v776 = vlog2.pop %v771
          %v777 = vmul.f32 %v776, 0.6931472
          %v778 = vlog2.pop %v772
          %v779 = vmul.f32 %v778, 0.6931472
          %v780 = vlog2.pop %v773
          %v781 = vmul.f32 %v780, 0.6931472
          %v782 = vsub.f32 %v737, %v775
          %v783 = vsub.f32 %v738, %v777
          %v784 = vsub.f32 %v739, %v779
          %v785 = vsub.f32 %v740, %v781
        $region112: #{_lambda_.1} parent=98 // loop_footer
          %s736 = sadd.s32 1, %s732
        $region113: #{_lambda_.1} parent=98 // loop_footer_branch
          %731 = sbr.rel target = $region109
        $region114: #{_lambda_.1} parent=98 // loop_exit
          _
        %v786 = vsel %vm551, %v737, 0.0
        %v787 = vsel %vm552, %v738, 0.0
        %v788 = vsel %vm553, %v739, 0.0
        %v789 = vsel %vm554, %v740, 0.0
        %v790 = vsub.f32 1.0, %v542
        %v791 = vsub.f32 1.0, %v543
        %v792 = vsub.f32 1.0, %v544
        %v793 = vsub.f32 1.0, %v545
        %v794 = vsel %vm551, %v542, %v790
        %v795 = vsel %vm552, %v543, %v791
        %v796 = vsel %vm553, %v544, %v792
        %v797 = vsel %vm554, %v545, %v793
        %v798 = vmax.f32 %v794, 1e-07
        %v799 = vmax.f32 %v795, 1e-07
        %v800 = vmax.f32 %v796, 1e-07
        %v801 = vmax.f32 %v797, 1e-07
        %v802 = vmin.f32 %v798, 0.9999999
        %v803 = vmin.f32 %v799, 0.9999999
        %v804 = vmin.f32 %v800, 0.9999999
        %v805 = vmin.f32 %v801, 0.9999999
        %v806 = vlog2.pop %v802
        %v807 = vmul.f32 %v806, 0.6931472
        %v808 = vlog2.pop %v803
        %v809 = vmul.f32 %v808, 0.6931472
        %v810 = vlog2.pop %v804
        %v811 = vmul.f32 %v810, 0.6931472
        %v812 = vlog2.pop %v805
        %v813 = vmul.f32 %v812, 0.6931472
        %v814 = vsub.f32 0.0, %v807
        %v815 = vsub.f32 0.0, %v809
        %v816 = vsub.f32 0.0, %v811
        %v817 = vsub.f32 0.0, %v813
        %vm818 = vcmp.gt.f32.partialorder %v537, 0.5
        %vm819 = vcmp.gt.f32.partialorder %v538, 0.5
        %vm820 = vcmp.gt.f32.partialorder %v539, 0.5
        %vm821 = vcmp.gt.f32.partialorder %v540, 0.5
        %vm822 = vmor %vm818, %vm551
        %vm823 = vmor %vm819, %vm552
        %vm824 = vmor %vm820, %vm553
        %vm825 = vmor %vm821, %vm554
        %v826 = vsel %vm822, %v814, 0.0
        %v827 = vsel %vm823, %v815, 0.0
        %v828 = vsel %vm824, %v816, 0.0
        %v829 = vsel %vm825, %v817, 0.0
        %v830 = vsel %vm822, 1, 0
        %v831 = vsel %vm823, 1, 0
        %v832 = vsel %vm824, 1, 0
        %v833 = vsel %vm825, 1, 0
        %v834 = vcvt.s32.f32 %v830
        %v835 = vcvt.s32.f32 %v831
        %v836 = vcvt.s32.f32 %v832
        %v837 = vcvt.s32.f32 %v833
        %v838 = vlaneseq
        %v839 = vand.u32 %v838, 127
        %vm840 = vcmp.eq.s32.totalorder %v839, 0
        %841 = vadd.xlane.f32.xlu0 %v727
        %v842 = vpop.xlane.xlu0 %841
        %843 = vadd.xlane.f32.xlu0 %v728
        %v844 = vpop.xlane.xlu0 %843
        %845 = vadd.xlane.f32.xlu0 %v729
        %v846 = vpop.xlane.xlu0 %845
        %847 = vadd.xlane.f32.xlu0 %v730
        %v848 = vpop.xlane.xlu0 %847
        %v849 = vsel %vm840, %v842, 0.0
        %v850 = vsel %vm840, %v844, 0.0
        %v851 = vsel %vm840, %v846, 0.0
        %v852 = vsel %vm840, %v848, 0.0
        %vm853 = vcmp.eq.s32.totalorder %v839, 1
        %854 = vadd.xlane.f32.xlu0 %v532
        %v855 = vpop.xlane.xlu0 %854
        %856 = vadd.xlane.f32.xlu0 %v533
        %v857 = vpop.xlane.xlu0 %856
        %858 = vadd.xlane.f32.xlu0 %v534
        %v859 = vpop.xlane.xlu0 %858
        %860 = vadd.xlane.f32.xlu0 %v535
        %v861 = vpop.xlane.xlu0 %860
        %v862 = vsel %vm853, %v855, %v849
        %v863 = vsel %vm853, %v857, %v850
        %v864 = vsel %vm853, %v859, %v851
        %v865 = vsel %vm853, %v861, %v852
        %vm866 = vcmp.eq.s32.totalorder %v839, 2
        %867 = vadd.xlane.f32.xlu0 %v786
        %v868 = vpop.xlane.xlu0 %867
        %869 = vadd.xlane.f32.xlu0 %v787
        %v870 = vpop.xlane.xlu0 %869
        %871 = vadd.xlane.f32.xlu0 %v788
        %v872 = vpop.xlane.xlu0 %871
        %873 = vadd.xlane.f32.xlu0 %v789
        %v874 = vpop.xlane.xlu0 %873
        %v875 = vsel %vm866, %v868, %v862
        %v876 = vsel %vm866, %v870, %v863
        %v877 = vsel %vm866, %v872, %v864
        %v878 = vsel %vm866, %v874, %v865
        %vm879 = vcmp.eq.s32.totalorder %v839, 3
        %880 = vadd.xlane.f32.xlu0 %v826
        %v881 = vpop.xlane.xlu0 %880
        %882 = vadd.xlane.f32.xlu0 %v827
        %v883 = vpop.xlane.xlu0 %882
        %884 = vadd.xlane.f32.xlu0 %v828
        %v885 = vpop.xlane.xlu0 %884
        %886 = vadd.xlane.f32.xlu0 %v829
        %v887 = vpop.xlane.xlu0 %886
        %v888 = vsel %vm879, %v881, %v875
        %v889 = vsel %vm879, %v883, %v876
        %v890 = vsel %vm879, %v885, %v877
        %v891 = vsel %vm879, %v887, %v878
        %vm892 = vcmp.eq.s32.totalorder %v839, 4
        %893 = vadd.xlane.f32.xlu0 %v834
        %v894 = vpop.xlane.xlu0 %893
        %895 = vadd.xlane.f32.xlu0 %v835
        %v896 = vpop.xlane.xlu0 %895
        %897 = vadd.xlane.f32.xlu0 %v836
        %v898 = vpop.xlane.xlu0 %897
        %899 = vadd.xlane.f32.xlu0 %v837
        %v900 = vpop.xlane.xlu0 %899
        %v901 = vsel %vm892, %v894, %v888
        %v902 = vsel %vm892, %v896, %v889
        %v903 = vsel %vm892, %v898, %v890
        %v904 = vsel %vm892, %v900, %v891
        %905 = vst [vmem:[%s490] sm:$0xff] %v901
        %906 = vst [vmem:[%s490 + $0x8] sm:$0xff] %v902
        %907 = vst [vmem:[%s490 + $0x10] sm:$0xff] %v903
        %908 = vst [vmem:[%s490 + $0x18] sm:$0xff] %v904
        %s909 = smul.u32 4, %s13
        %p910 = scmp.lt.s32.totalorder %s909, 7
        %s911 = scalar_select %p910, %s909, 7
        %s912 = smul.addr %s911, 8
        %s913 = scalar_lea.vmem %s2, %s912
        // Predicated region
        $region115: #{_lambda_.1} parent=98 // pred_check
          %p914 = pneg %p83
        $region116: #{_lambda_.1} parent=98 // pred_check_branch
          %916 = sbr.rel (%p914) target = $region118
        $region117: #{_lambda_.1} parent=98 // pred_region
          %s917 = smul.u32 4, %s13
        $region118: #{_lambda_.1} parent=98 // pred_fallthru
          _
      $region99: #{_lambda_.1} parent=5 // pred_fallthru
        _
      %p918 = scmp.le.s32.totalorder 2, %s8
      // Predicated region
      $region119: #{_lambda_.1} parent=5 // pred_check
        %p919 = pneg %p918
      $region120: #{_lambda_.1} parent=5 // pred_check_branch
        %921 = sbr.rel (%p919) target = $region122
      $region121: #{_lambda_.1} parent=5 // pred_region
        %s922 = ssub.s32 %s8, 2
        // Predicated region
        $region123: #{_lambda_.1} parent=121 // pred_check
          %p923 = pneg %p89
        $region124: #{_lambda_.1} parent=121 // pred_check_branch
          %925 = sbr.rel (%p923) target = $region126
        $region125: #{_lambda_.1} parent=121 // pred_region
          %s926 = smul.u32 4, %s14
          %p927 = scmp.lt.s32.totalorder %s926, 7
          %s928 = scalar_select %p927, %s926, 7
          %s929 = smul.addr %s928, 8
          %s930 = scalar_lea.vmem %s2, %s929
        $region126: #{_lambda_.1} parent=121 // pred_fallthru
          _
      $region122: #{_lambda_.1} parent=5 // pred_fallthru
        _
    $region6: #{_lambda_.1} parent=1 // loop_footer
      %s12 = sadd.s32 1, %s8
    $region7: #{_lambda_.1} parent=1 // loop_footer_branch
      %7 = sbr.rel target = $region3
    $region8: #{_lambda_.1} parent=1 // loop_exit
      _

</llo_original>
